<compile_context>
chip_gen: v5e
topology: v5e:2x2
jax: 0.10.0
libtpu: 0.0.40
codegen_flags: <defaults>
</compile_context>

<pallas_src>
import numpy as np
import jax
import jax.numpy as jnp
from jax import lax
from jax.experimental import pallas as pl
from jax.experimental.pallas import tpu as pltpu

# ----------------------------- model configuration (small) -----------------------------
BATCH = 2
T_AUDIO = 170          # raw audio samples
CONV_DIM = 16          # conv feature channels
K0, STRIDE0 = 10, 5    # conv layer 0
K1, STRIDE1 = 3, 2     # conv layer 1
HIDDEN = 32            # transformer hidden size
NUM_HEADS = 4
HEAD_DIM = HIDDEN // NUM_HEADS
FFN_DIM = 64
NUM_LAYERS = 2         # -> num_hidden_layers + 1 = 3 hidden states
POS_K = 4              # positional conv kernel (even -> SamePad removes last frame)
POS_G = 4              # positional conv groups

NCHUNK = T_AUDIO // STRIDE0            # 34
S0 = (T_AUDIO - K0) // STRIDE0 + 1     # 33
SEQ = (S0 - K1) // STRIDE1 + 1         # 16
NCHUNK_PAD = 40                        # sublane-aligned chunk rows (>= NCHUNK, mult of 8)
CHUNK_LANES = 8                        # lane-pad STRIDE0 (5) -> 8
HS = NUM_HEADS * SEQ                   # 64: packed attention column width
LANES = 128

# In-kernel conv0 windowing uses the "two consecutive stride-chunks" identity.
assert T_AUDIO % STRIDE0 == 0 and K0 == 2 * STRIDE0 and NCHUNK == S0 + 1

# frontend / shared-constant slab row offsets (all multiples of 8)
R_SEL0B, R_SEL1, R_SELP = 0, 40, 88
R_C0WA, R_C0WB, R_C1W = 152, 160, 168
R_FPW, R_POSW, R_FEVEC = 216, 232, 360
R_REPT, R_MASKSV, R_SEGSUM = 376, 440, 504
FE_ROWS = 568

# per-layer weight slab row offsets
L_QKV, L_O, L_FC1, L_FC2, L_VEC = 0, 32, 64, 96, 160
LW_ROWS = 168

_SQRT_2_OVER_PI = 0.7978845608028654


def _gelu(x):
    # TODO(synk): HuBERT/MERT use exact erf GELU; tanh approximation differs by < 1e-3.
    return 0.5 * x * (1.0 + jnp.tanh(_SQRT_2_OVER_PI * (x + 0.044715 * x * x * x)))


def _ln(x, g, b, eps=1e-5):
    mu = jnp.mean(x, axis=-1, keepdims=True)
    var = jnp.mean((x - mu) ** 2, axis=-1, keepdims=True)
    return (x - mu) * lax.rsqrt(var + eps) * g + b


# ----------------------------- the single fused Pallas kernel -----------------------------
def _mert_kernel(chunks_ref, fe_ref, lw_ref, hs_ref, carry_ref):
    """grid = (batch, num_layers + 1). Step (b, 0): conv front-end; (b, l>=1): encoder
    layer l-1. Hidden state lives in a per-batch VMEM carry; every step writes one
    lane-dense (SEQ, 128) hidden-state block (sliced to D in the wrapper)."""
    l = pl.program_id(1)

    # ------------------------------- frontend (l == 0) -------------------------------
    @pl.when(l == 0)
    def _frontend():
        fv = fe_ref[R_FEVEC:R_FEVEC + 16, :]
        conv0_b  = fv[0:1, :CONV_DIM]
        gn_g     = fv[1:2, :CONV_DIM]
        gn_b     = fv[2:3, :CONV_DIM]
        conv1_b  = fv[3:4, :CONV_DIM]
        fp_ln_g  = fv[4:5, :CONV_DIM]
        fp_ln_b  = fv[5:6, :CONV_DIM]
        fp_b     = fv[6:7, :HIDDEN]
        pos_b    = fv[7:8, :HIDDEN]
        enc_ln_g = fv[8:9, :HIDDEN]
        enc_ln_b = fv[9:10, :HIDDEN]

        x = chunks_ref[...]                               # (40, 8); padded rows/lanes are zero

        # 1. Wav2Vec2FeatureExtractor: per-utterance zero-mean / unit-variance
        #    (sum / sum-of-squares over the true T_AUDIO samples; zero padding is inert)
        s1 = jnp.sum(jnp.sum(x, axis=1, keepdims=True), axis=0, keepdims=True)
        s2 = jnp.sum(jnp.sum(x * x, axis=1, keepdims=True), axis=0, keepdims=True)
        mu = s1 / float(T_AUDIO)
        var = s2 / float(T_AUDIO) - mu * mu
        xn = (x - mu) * lax.rsqrt(var + 1e-7)

        # 2a. conv0 (k=10, s=5): window s = [chunk s | chunk s+1]; tap-B shift via a
        #     precomputed selection matmul (gather-as-matmul, no unaligned slices)
        tap_b = jnp.dot(fe_ref[R_SEL0B:R_SEL0B + NCHUNK_PAD, :NCHUNK_PAD], xn,
                        preferred_element_type=jnp.float32)
        h0 = (jnp.dot(xn, fe_ref[R_C0WA:R_C0WA + CHUNK_LANES, :CONV_DIM],
                      preferred_element_type=jnp.float32)
              + jnp.dot(tap_b, fe_ref[R_C0WB:R_C0WB + CHUNK_LANES, :CONV_DIM],
                        preferred_element_type=jnp.float32)
              + conv0_b)                                   # (40, 16); rows >= S0 are padding

        #     GroupNorm(num_groups == channels): per-channel norm over the S0 valid frames
        vmask = (lax.broadcasted_iota(jnp.int32, (NCHUNK_PAD, 1), 0) < S0).astype(jnp.float32)
        gmu = jnp.sum(h0 * vmask, axis=0, keepdims=True) / float(S0)
        d0 = (h0 - gmu) * vmask
        gvar = jnp.sum(d0 * d0, axis=0, keepdims=True) / float(S0)
        g0 = _gelu((h0 - gmu) * lax.rsqrt(gvar + 1e-5) * gn_g + gn_b)

        # 2b. conv1 (k=3, s=2) + GELU: all 3 strided taps from one stacked selection matmul
        taps = jnp.dot(fe_ref[R_SEL1:R_SEL1 + K1 * SEQ, :NCHUNK_PAD], g0,
                       preferred_element_type=jnp.float32)       # (48, 16)
        c1w = fe_ref[R_C1W:R_C1W + K1 * CONV_DIM, :CONV_DIM]     # (48, 16)
        h1 = conv1_b
        for k in range(K1):
            h1 = h1 + jnp.dot(taps[k * SEQ:(k + 1) * SEQ, :],
                              c1w[k * CONV_DIM:(k + 1) * CONV_DIM, :],
                              preferred_element_type=jnp.float32)
        h1 = _gelu(h1)                                     # (16, 16)

        # 3. feature projection: LayerNorm + Linear(conv_dim -> hidden)
        hf = jnp.dot(_ln(h1, fp_ln_g, fp_ln_b),
                     fe_ref[R_FPW:R_FPW + CONV_DIM, :HIDDEN],
                     preferred_element_type=jnp.float32) + fp_b  # (16, 32)

        # 4. grouped positional conv (block-diagonal dense), SamePad trim + GELU,
        #    residual add, encoder LayerNorm
        # TODO(synk): pretrained HuBERT pos_conv uses weight_norm; fold w_g*w_v/||w_v|| host-side.
        selp = fe_ref[R_SELP:R_SELP + POS_K * SEQ, :SEQ]         # (64, 16) shift selections
        posw = fe_ref[R_POSW:R_POSW + POS_K * HIDDEN, :HIDDEN]   # (128, 32) block-diag weights
        pos = pos_b
        for k in range(POS_K):
            win = jnp.dot(selp[k * SEQ:(k + 1) * SEQ, :], hf,
                          preferred_element_type=jnp.float32)
            pos = pos + jnp.dot(win, posw[k * HIDDEN:(k + 1) * HIDDEN, :],
                                preferred_element_type=jnp.float32)
        pos = _gelu(pos)
        carry_ref[...] = _ln(hf + pos, enc_ln_g, enc_ln_b)

    # ------------------------------ encoder layer (l >= 1) ------------------------------
    @pl.when(l > 0)
    def _layer():
        h = carry_ref[...]                                 # (16, 32) persistent hidden state

        lvec = lw_ref[L_VEC:L_VEC + 8, :]                  # packed biases / LN params
        qkv_b = lvec[0:1, :]
        o_b   = lvec[1:2, :HIDDEN]
        ln1_g = lvec[2:3, :HIDDEN]
        ln1_b = lvec[3:4, :HIDDEN]
        fc1_b = lvec[4:5, :FFN_DIM]
        fc2_b = lvec[5:6, :HIDDEN]
        ln2_g = lvec[6:7, :HIDDEN]
        ln2_b = lvec[7:8, :HIDDEN]

        rept    = fe_ref[R_REPT:R_REPT + HS, :SEQ]         # (64, 16) seq-replication
        mask_sv = fe_ref[R_MASKSV:R_MASKSV + HS, :HIDDEN]  # (64, 32) head block-diag mask
        seg_sum = fe_ref[R_SEGSUM:R_SEGSUM + HS, :HS]      # (64, 64) per-head sum broadcast

        # fused QKV projection: one lane-dense (32, 128) weight block
        qkv = jnp.dot(h, lw_ref[L_QKV:L_QKV + HIDDEN, :],
                      preferred_element_type=jnp.float32) + qkv_b      # (16, 128)
        q = qkv[:, 0:HIDDEN]
        k = qkv[:, HIDDEN:2 * HIDDEN]
        v = qkv[:, 2 * HIDDEN:3 * HIDDEN]

        # block-diagonal head packing: all heads as two lane-dense MXU ops per layer.
        #   kbd_t[h*S+s, d] = k[s, d] * [d // head_dim == h]   (same for v)
        kbd_t = jnp.dot(rept, k, preferred_element_type=jnp.float32) * mask_sv   # (64, 32)
        vbd   = jnp.dot(rept, v, preferred_element_type=jnp.float32) * mask_sv   # (64, 32)
        s = lax.dot_general(q, kbd_t, (((1,), (1,)), ((), ())),
                            preferred_element_type=jnp.float32) * (HEAD_DIM ** -0.5)  # (16, 64)
        # global row-max subtraction is exact for the per-head softmax (constant shift)
        s = s - jnp.max(s, axis=-1, keepdims=True)
        e = jnp.exp(s)
        denom = jnp.dot(e, seg_sum, preferred_element_type=jnp.float32)  # per-head sums, broadcast
        p = e * pl.reciprocal(denom, approx=True)
        ctx = jnp.dot(p, vbd, preferred_element_type=jnp.float32)        # (16, 32) merged heads

        attn = jnp.dot(ctx, lw_ref[L_O:L_O + HIDDEN, :HIDDEN],
                       preferred_element_type=jnp.float32) + o_b
        h1 = _ln(attn + h, ln1_g, ln1_b)
        ff = _gelu(jnp.dot(h1, lw_ref[L_FC1:L_FC1 + HIDDEN, :FFN_DIM],
                           preferred_element_type=jnp.float32) + fc1_b)
        ff = jnp.dot(ff, lw_ref[L_FC2:L_FC2 + FFN_DIM, :HIDDEN],
                     preferred_element_type=jnp.float32) + fc2_b
        carry_ref[...] = _ln(ff + h1, ln2_g, ln2_b)

    # lane-dense hidden-state writeback (D padded to 128; wrapper strips the padding)
    hs_ref[...] = jnp.concatenate(
        [carry_ref[...], jnp.zeros((SEQ, LANES - HIDDEN), jnp.float32)], axis=-1)


# ----------------------------- parameter packing (one-time layout prep) -----------------------------
def _const_slab_np():
    """Selection matrices (strided conv windows, pos-conv shifts) and attention
    head-packing constants, precomputed host-side into the resident slab."""
    fe = np.zeros((FE_ROWS, LANES), np.float32)
    for s in range(S0):                                   # conv0 tap B: row s <- chunk s+1
        fe[R_SEL0B + s, s + 1] = 1.0
    for k in range(K1):                                   # conv1 strided taps
        for i in range(SEQ):
            fe[R_SEL1 + k * SEQ + i, STRIDE1 * i + k] = 1.0
    half = POS_K // 2
    for k in range(POS_K):                                # pos-conv shifted windows (zero pad)
        for i in range(SEQ):
            j = i + k - half
            if 0 <= j < SEQ:
                fe[R_SELP + k * SEQ + i, j] = 1.0
    for h in range(NUM_HEADS):                            # attention block-diagonal packing
        for s in range(SEQ):
            fe[R_REPT + h * SEQ + s, s] = 1.0
            fe[R_MASKSV + h * SEQ + s, h * HEAD_DIM:(h + 1) * HEAD_DIM] = 1.0
        fe[R_SEGSUM + h * SEQ:R_SEGSUM + (h + 1) * SEQ, h * SEQ:(h + 1) * SEQ] = 1.0
    return fe


def pack_params(params):
    """Pack everything into two lane-dense slabs: a resident frontend/const slab
    (568, 128) and one (168, 128) weight slab per layer (single DMA per layer)."""
    fe = jnp.asarray(_const_slab_np())

    c0 = params["conv0_w"]                                # (K0, C)
    fe = fe.at[R_C0WA:R_C0WA + STRIDE0, :CONV_DIM].set(c0[:STRIDE0])
    fe = fe.at[R_C0WB:R_C0WB + STRIDE0, :CONV_DIM].set(c0[STRIDE0:])
    fe = fe.at[R_C1W:R_C1W + K1 * CONV_DIM, :CONV_DIM].set(params["conv1_w"])
    fe = fe.at[R_FPW:R_FPW + CONV_DIM, :HIDDEN].set(params["fp_w"])

    # grouped pos-conv folded into a block-diagonal dense (POS_K*D, D) weight
    # TODO(synk): fold weight_norm (w_g * w_v / ||w_v||) here for pretrained weights.
    dg = HIDDEN // POS_G
    for g in range(POS_G):
        for k in range(POS_K):
            fe = fe.at[R_POSW + k * HIDDEN + g * dg:R_POSW + k * HIDDEN + (g + 1) * dg,
                       g * dg:(g + 1) * dg].set(params["pos_w"][g, k * dg:(k + 1) * dg, :])

    fe_rows = [params["conv0_b"], params["gn_g"], params["gn_b"], params["conv1_b"],
               params["fp_ln_g"], params["fp_ln_b"], params["fp_b"], params["pos_b"],
               params["enc_ln_g"], params["enc_ln_b"]]
    for i, vec in enumerate(fe_rows):
        fe = fe.at[R_FEVEC + i, :vec.shape[0]].set(vec)

    def pad_w(w):
        return jnp.pad(w, ((0, 0), (0, LANES - w.shape[1])))

    def pad_v(v):
        return jnp.pad(v, (0, LANES - v.shape[0]))

    layer_slabs = []
    for lp in params["layers"]:
        qkv_w = jnp.concatenate([lp["q_w"], lp["k_w"], lp["v_w"]], axis=1)   # (D, 3D)
        vec = jnp.stack([
            pad_v(jnp.concatenate([lp["q_b"], lp["k_b"], lp["v_b"]])),
            pad_v(lp["o_b"]), pad_v(lp["ln1_g"]), pad_v(lp["ln1_b"]),
            pad_v(lp["fc1_b"]), pad_v(lp["fc2_b"]), pad_v(lp["ln2_g"]), pad_v(lp["ln2_b"]),
        ])
        layer_slabs.append(jnp.concatenate([
            pad_w(qkv_w), pad_w(lp["o_w"]), pad_w(lp["fc1_w"]), pad_w(lp["fc2_w"]), vec,
        ], axis=0))                                        # (168, 128)
    lw = jnp.stack(layer_slabs)                            # (L, 168, 128)
    return fe, lw


# ----------------------------- forward pass -----------------------------
def mert_apply(audio, fe_slab, layer_slab):
    b = audio.shape[0]
    chunks = audio.astype(jnp.float32).reshape(b, NCHUNK, STRIDE0)
    chunks = jnp.pad(chunks, ((0, 0), (0, NCHUNK_PAD - NCHUNK), (0, CHUNK_LANES - STRIDE0)))

    hs = pl.pallas_call(
        _mert_kernel,
        grid=(BATCH, NUM_LAYERS + 1),
        in_specs=[
            pl.BlockSpec((None, NCHUNK_PAD, CHUNK_LANES), lambda bi, li: (bi, 0, 0)),
            pl.BlockSpec((FE_ROWS, LANES), lambda bi, li: (0, 0)),       # resident const slab
            pl.BlockSpec((None, LW_ROWS, LANES),
                         lambda bi, li: (jnp.maximum(li - 1, 0), 0, 0)),  # per-layer weight slab
        ],
        out_specs=pl.BlockSpec((None, None, SEQ, LANES), lambda bi, li: (li, bi, 0, 0)),
        out_shape=jax.ShapeDtypeStruct((NUM_LAYERS + 1, BATCH, SEQ, LANES), jnp.float32),
        scratch_shapes=[pltpu.VMEM((SEQ, HIDDEN), jnp.float32)],  # per-batch hidden-state carry
        # batch axis "parallel" -> each v7x TensorCore takes one batch element with its own
        # carry; layer axis is the sequential carry. No-op on single-TC v5e/v6e.
        compiler_params=pltpu.CompilerParams(dimension_semantics=("parallel", "arbitrary")),
    )(chunks, fe_slab, layer_slab)

    hs = hs[:, :, :, :HIDDEN]                              # strip lane padding
    hidden_states = tuple(hs[i] for i in range(NUM_LAYERS + 1))
    return {
        "last_hidden_state": hidden_states[-1],
        "pooler_output": None,
        "hidden_states": hidden_states,
    }


def mert_forward(audio, params):
    fe_slab, layer_slab = pack_params(params)
    return mert_apply(audio, fe_slab, layer_slab)


# ----------------------------- deterministic synthetic parameters -----------------------------
class _KeyGen:
    def __init__(self, key):
        self._key = key

    def __call__(self):
        self._key, sub = jax.random.split(self._key)
        return sub


def init_params(key):
    kg = _KeyGen(key)
    w = lambda shape: 0.05 * jax.random.normal(kg(), shape, jnp.float32)
    z = lambda shape: jnp.zeros(shape, jnp.float32)
    ones = lambda shape: jnp.ones(shape, jnp.float32)
    dg = HIDDEN // POS_G

    params = {
        "conv0_w": w((K0 * 1, CONV_DIM)), "conv0_b": z((CONV_DIM,)),
        "gn_g": ones((CONV_DIM,)), "gn_b": z((CONV_DIM,)),
        "conv1_w": w((K1 * CONV_DIM, CONV_DIM)), "conv1_b": z((CONV_DIM,)),
        "fp_ln_g": ones((CONV_DIM,)), "fp_ln_b": z((CONV_DIM,)),
        "fp_w": w((CONV_DIM, HIDDEN)), "fp_b": z((HIDDEN,)),
        "pos_w": w((POS_G, POS_K * dg, dg)), "pos_b": z((HIDDEN,)),
        "enc_ln_g": ones((HIDDEN,)), "enc_ln_b": z((HIDDEN,)),
        "layers": [],
    }
    for _ in range(NUM_LAYERS):
        params["layers"].append({
            "q_w": w((HIDDEN, HIDDEN)), "q_b": z((HIDDEN,)),
            "k_w": w((HIDDEN, HIDDEN)), "k_b": z((HIDDEN,)),
            "v_w": w((HIDDEN, HIDDEN)), "v_b": z((HIDDEN,)),
            "o_w": w((HIDDEN, HIDDEN)), "o_b": z((HIDDEN,)),
            "ln1_g": ones((HIDDEN,)), "ln1_b": z((HIDDEN,)),
            "fc1_w": w((HIDDEN, FFN_DIM)), "fc1_b": z((FFN_DIM,)),
            "fc2_w": w((FFN_DIM, HIDDEN)), "fc2_b": z((HIDDEN,)),
            "ln2_g": ones((HIDDEN,)), "ln2_b": z((HIDDEN,)),
        })
    return params


# ----------------------------- main -----------------------------
if __name__ == "__main__":
    key = jax.random.PRNGKey(0)
    pkey, akey = jax.random.split(key)
    params = init_params(pkey)
    audio = jax.random.normal(akey, (BATCH, T_AUDIO), jnp.float32)

    fe_slab, layer_slab = pack_params(params)             # one-time host-side layout prep
    fwd = jax.jit(mert_apply)
    out = fwd(audio, fe_slab, layer_slab)
    jax.block_until_ready(out["last_hidden_state"])
    jax.block_until_ready(out["hidden_states"])

    assert out["last_hidden_state"].shape == (BATCH, SEQ, HIDDEN)
    assert out["pooler_output"] is None
    assert len(out["hidden_states"]) == NUM_LAYERS + 1
    for hsi in out["hidden_states"]:
        assert hsi.shape == (BATCH, SEQ, HIDDEN)

    print("KERNEL_OK")
</pallas_src>

<mosaic_0001>
module attributes {stable_mosaic.version = 11 : i64} {
  func.func @_mert_kernel(%arg0: i32, %arg1: i32, %arg2: memref<1x40x8xf32, #tpu.memory_space<vmem>>, %arg3: memref<568x128xf32, #tpu.memory_space<vmem>>, %arg4: memref<1x168x128xf32, #tpu.memory_space<vmem>>, %arg5: memref<1x1x16x128xf32, #tpu.memory_space<vmem>>, %arg6: memref<16x32xf32, #tpu.memory_space<vmem>>) attributes {dimension_semantics = [#tpu.dimension_semantics<parallel>, #tpu.dimension_semantics<arbitrary>], iteration_bounds = array<i64: 2, 3>, scalar_prefetch = 0 : i64, scratch_operands = 1 : i64, tpu.core_type = #tpu.core_type<tc>, window_params = [{transform_indices = @transform_0, window_bounds = array<i64: 1, 40, 8>}, {pipeline_mode = #tpu.pipeline_mode<synchronous>, transform_indices = @transform_1, window_bounds = array<i64: 568, 128>}, {transform_indices = @transform_2, window_bounds = array<i64: 1, 168, 128>}, {transform_indices = @transform_3, window_bounds = array<i64: 1, 1, 16, 128>}]} {
    %c0_i32 = arith.constant 0 : i32
    %0 = arith.cmpi eq, %arg1, %c0_i32 : i32
    %1 = arith.extui %0 : i1 to i32
    %c0_i32_0 = arith.constant 0 : i32
    %2 = arith.cmpi ne, %1, %c0_i32_0 : i32
    scf.if %2 {
      %c360 = arith.constant 360 : index
      %c0_8 = arith.constant 0 : index
      %12 = vector.load %arg3[%c360, %c0_8] : memref<568x128xf32, #tpu.memory_space<vmem>>, vector<16x128xf32>
      %13 = vector.extract_strided_slice %12 {offsets = [0, 0], sizes = [1, 16], strides = [1, 1]} : vector<16x128xf32> to vector<1x16xf32>
      %14 = vector.extract_strided_slice %12 {offsets = [1, 0], sizes = [1, 16], strides = [1, 1]} : vector<16x128xf32> to vector<1x16xf32>
      %15 = vector.extract_strided_slice %12 {offsets = [2, 0], sizes = [1, 16], strides = [1, 1]} : vector<16x128xf32> to vector<1x16xf32>
      %16 = vector.extract_strided_slice %12 {offsets = [3, 0], sizes = [1, 16], strides = [1, 1]} : vector<16x128xf32> to vector<1x16xf32>
      %17 = vector.extract_strided_slice %12 {offsets = [4, 0], sizes = [1, 16], strides = [1, 1]} : vector<16x128xf32> to vector<1x16xf32>
      %18 = vector.extract_strided_slice %12 {offsets = [5, 0], sizes = [1, 16], strides = [1, 1]} : vector<16x128xf32> to vector<1x16xf32>
      %19 = vector.extract_strided_slice %12 {offsets = [6, 0], sizes = [1, 32], strides = [1, 1]} : vector<16x128xf32> to vector<1x32xf32>
      %20 = vector.extract_strided_slice %12 {offsets = [7, 0], sizes = [1, 32], strides = [1, 1]} : vector<16x128xf32> to vector<1x32xf32>
      %21 = vector.extract_strided_slice %12 {offsets = [8, 0], sizes = [1, 32], strides = [1, 1]} : vector<16x128xf32> to vector<1x32xf32>
      %22 = vector.extract_strided_slice %12 {offsets = [9, 0], sizes = [1, 32], strides = [1, 1]} : vector<16x128xf32> to vector<1x32xf32>
      %c0_9 = arith.constant 0 : index
      %c0_10 = arith.constant 0 : index
      %c0_11 = arith.constant 0 : index
      %23 = vector.load %arg2[%c0_9, %c0_10, %c0_11] : memref<1x40x8xf32, #tpu.memory_space<vmem>>, vector<1x40x8xf32>
      %24 = vector.shape_cast %23 : vector<1x40x8xf32> to vector<40x8xf32>
      %cst_12 = arith.constant dense<0.000000e+00> : vector<40xf32>
      %25 = vector.multi_reduction <add>, %24, %cst_12 [1] : vector<40x8xf32> to vector<40xf32>
      %26 = vector.shape_cast %25 : vector<40xf32> to vector<40x1xf32>
      %cst_13 = arith.constant dense<0.000000e+00> : vector<1xf32>
      %27 = vector.multi_reduction <add>, %26, %cst_13 [0] : vector<40x1xf32> to vector<1xf32>
      %28 = vector.shape_cast %27 : vector<1xf32> to vector<1x1xf32>
      %29 = arith.mulf %24, %24 : vector<40x8xf32>
      %cst_14 = arith.constant dense<0.000000e+00> : vector<40xf32>
      %30 = vector.multi_reduction <add>, %29, %cst_14 [1] : vector<40x8xf32> to vector<40xf32>
      %31 = vector.shape_cast %30 : vector<40xf32> to vector<40x1xf32>
      %cst_15 = arith.constant dense<0.000000e+00> : vector<1xf32>
      %32 = vector.multi_reduction <add>, %31, %cst_15 [0] : vector<40x1xf32> to vector<1xf32>
      %33 = vector.shape_cast %32 : vector<1xf32> to vector<1x1xf32>
      %cst_16 = arith.constant 1.700000e+02 : f32
      %34 = vector.broadcast %cst_16 : f32 to vector<1x1xf32>
      %35 = arith.divf %28, %34 : vector<1x1xf32>
      %cst_17 = arith.constant 1.700000e+02 : f32
      %36 = vector.broadcast %cst_17 : f32 to vector<1x1xf32>
      %37 = arith.divf %33, %36 : vector<1x1xf32>
      %38 = arith.mulf %35, %35 : vector<1x1xf32>
      %39 = arith.subf %37, %38 : vector<1x1xf32>
      %40 = vector.broadcast %35 : vector<1x1xf32> to vector<40x8xf32>
      %41 = arith.subf %24, %40 : vector<40x8xf32>
      %cst_18 = arith.constant 1.000000e-07 : f32
      %42 = vector.broadcast %cst_18 : f32 to vector<1x1xf32>
      %43 = arith.addf %39, %42 : vector<1x1xf32>
      %44 = math.rsqrt %43 : vector<1x1xf32>
      %45 = vector.broadcast %44 : vector<1x1xf32> to vector<40x8xf32>
      %46 = arith.mulf %41, %45 : vector<40x8xf32>
      %c0_19 = arith.constant 0 : index
      %c0_20 = arith.constant 0 : index
      %47 = vector.load %arg3[%c0_19, %c0_20] : memref<568x128xf32, #tpu.memory_space<vmem>>, vector<40x40xf32>
      %cst_21 = arith.constant dense<0.000000e+00> : vector<40x8xf32>
      %48 = tpu.matmul %47, %46, %cst_21 {dimension_numbers = #tpu.dot_dimension_numbers<[1], [0], [0], [1], [0, 0, 1, 1], [], []>} : vector<40x40xf32>, vector<40x8xf32>, vector<40x8xf32> -> vector<40x8xf32>
      %c152 = arith.constant 152 : index
      %c0_22 = arith.constant 0 : index
      %49 = vector.load %arg3[%c152, %c0_22] : memref<568x128xf32, #tpu.memory_space<vmem>>, vector<8x16xf32>
      %cst_23 = arith.constant dense<0.000000e+00> : vector<40x16xf32>
      %50 = tpu.matmul %46, %49, %cst_23 {dimension_numbers = #tpu.dot_dimension_numbers<[1], [0], [0], [1], [0, 0, 1, 1], [], []>} : vector<40x8xf32>, vector<8x16xf32>, vector<40x16xf32> -> vector<40x16xf32>
      %c160 = arith.constant 160 : index
      %c0_24 = arith.constant 0 : index
      %51 = vector.load %arg3[%c160, %c0_24] : memref<568x128xf32, #tpu.memory_space<vmem>>, vector<8x16xf32>
      %cst_25 = arith.constant dense<0.000000e+00> : vector<40x16xf32>
      %52 = tpu.matmul %48, %51, %cst_25 {dimension_numbers = #tpu.dot_dimension_numbers<[1], [0], [0], [1], [0, 0, 1, 1], [], []>} : vector<40x8xf32>, vector<8x16xf32>, vector<40x16xf32> -> vector<40x16xf32>
      %53 = arith.addf %50, %52 : vector<40x16xf32>
      %54 = vector.broadcast %13 : vector<1x16xf32> to vector<40x16xf32>
      %55 = arith.addf %53, %54 : vector<40x16xf32>
      %56 = tpu.iota {dimensions = array<i32: 0>} : vector<40x1xi32>
      %c33_i32 = arith.constant 33 : i32
      %57 = vector.broadcast %c33_i32 : i32 to vector<40x1xi32>
      %58 = arith.cmpi slt, %56, %57 : vector<40x1xi32>
      %59 = arith.extui %58 : vector<40x1xi1> to vector<40x1xi32>
      %60 = arith.sitofp %59 : vector<40x1xi32> to vector<40x1xf32>
      %61 = vector.broadcast %60 : vector<40x1xf32> to vector<40x16xf32>
      %62 = arith.mulf %55, %61 : vector<40x16xf32>
      %cst_26 = arith.constant dense<0.000000e+00> : vector<16xf32>
      %63 = vector.multi_reduction <add>, %62, %cst_26 [0] : vector<40x16xf32> to vector<16xf32>
      %64 = vector.shape_cast %63 : vector<16xf32> to vector<1x16xf32>
      %cst_27 = arith.constant 3.300000e+01 : f32
      %65 = vector.broadcast %cst_27 : f32 to vector<1x16xf32>
      %66 = arith.divf %64, %65 : vector<1x16xf32>
      %67 = vector.broadcast %66 : vector<1x16xf32> to vector<40x16xf32>
      %68 = arith.subf %55, %67 : vector<40x16xf32>
      %69 = vector.broadcast %60 : vector<40x1xf32> to vector<40x16xf32>
      %70 = arith.mulf %68, %69 : vector<40x16xf32>
      %71 = arith.mulf %70, %70 : vector<40x16xf32>
      %cst_28 = arith.constant dense<0.000000e+00> : vector<16xf32>
      %72 = vector.multi_reduction <add>, %71, %cst_28 [0] : vector<40x16xf32> to vector<16xf32>
      %73 = vector.shape_cast %72 : vector<16xf32> to vector<1x16xf32>
      %cst_29 = arith.constant 3.300000e+01 : f32
      %74 = vector.broadcast %cst_29 : f32 to vector<1x16xf32>
      %75 = arith.divf %73, %74 : vector<1x16xf32>
      %76 = vector.broadcast %66 : vector<1x16xf32> to vector<40x16xf32>
      %77 = arith.subf %55, %76 : vector<40x16xf32>
      %cst_30 = arith.constant 9.99999974E-6 : f32
      %78 = vector.broadcast %cst_30 : f32 to vector<1x16xf32>
      %79 = arith.addf %75, %78 : vector<1x16xf32>
      %80 = math.rsqrt %79 : vector<1x16xf32>
      %81 = vector.broadcast %80 : vector<1x16xf32> to vector<40x16xf32>
      %82 = arith.mulf %77, %81 : vector<40x16xf32>
      %83 = vector.broadcast %14 : vector<1x16xf32> to vector<40x16xf32>
      %84 = arith.mulf %82, %83 : vector<40x16xf32>
      %85 = vector.broadcast %15 : vector<1x16xf32> to vector<40x16xf32>
      %86 = arith.addf %84, %85 : vector<40x16xf32>
      %cst_31 = arith.constant 5.000000e-01 : f32
      %87 = vector.broadcast %cst_31 : f32 to vector<40x16xf32>
      %88 = arith.mulf %87, %86 : vector<40x16xf32>
      %cst_32 = arith.constant 4.471500e-02 : f32
      %89 = vector.broadcast %cst_32 : f32 to vector<40x16xf32>
      %90 = arith.mulf %89, %86 : vector<40x16xf32>
      %91 = arith.mulf %90, %86 : vector<40x16xf32>
      %92 = arith.mulf %91, %86 : vector<40x16xf32>
      %93 = arith.addf %86, %92 : vector<40x16xf32>
      %cst_33 = arith.constant 0.797884583 : f32
      %94 = vector.broadcast %cst_33 : f32 to vector<40x16xf32>
      %95 = arith.mulf %94, %93 : vector<40x16xf32>
      %96 = math.tanh %95 : vector<40x16xf32>
      %cst_34 = arith.constant 1.000000e+00 : f32
      %97 = vector.broadcast %cst_34 : f32 to vector<40x16xf32>
      %98 = arith.addf %97, %96 : vector<40x16xf32>
      %99 = arith.mulf %88, %98 : vector<40x16xf32>
      %c40 = arith.constant 40 : index
      %c0_35 = arith.constant 0 : index
      %100 = vector.load %arg3[%c40, %c0_35] : memref<568x128xf32, #tpu.memory_space<vmem>>, vector<48x40xf32>
      %cst_36 = arith.constant dense<0.000000e+00> : vector<48x16xf32>
      %101 = tpu.matmul %100, %99, %cst_36 {dimension_numbers = #tpu.dot_dimension_numbers<[1], [0], [0], [1], [0, 0, 1, 1], [], []>} : vector<48x40xf32>, vector<40x16xf32>, vector<48x16xf32> -> vector<48x16xf32>
      %c168 = arith.constant 168 : index
      %c0_37 = arith.constant 0 : index
      %102 = vector.load %arg3[%c168, %c0_37] : memref<568x128xf32, #tpu.memory_space<vmem>>, vector<48x16xf32>
      %103 = vector.extract_strided_slice %101 {offsets = [0, 0], sizes = [16, 16], strides = [1, 1]} : vector<48x16xf32> to vector<16x16xf32>
      %104 = vector.extract_strided_slice %102 {offsets = [0, 0], sizes = [16, 16], strides = [1, 1]} : vector<48x16xf32> to vector<16x16xf32>
      %cst_38 = arith.constant dense<0.000000e+00> : vector<16x16xf32>
      %105 = tpu.matmul %103, %104, %cst_38 {dimension_numbers = #tpu.dot_dimension_numbers<[1], [0], [0], [1], [0, 0, 1, 1], [], []>} : vector<16x16xf32>, vector<16x16xf32>, vector<16x16xf32> -> vector<16x16xf32>
      %106 = vector.broadcast %16 : vector<1x16xf32> to vector<16x16xf32>
      %107 = arith.addf %106, %105 : vector<16x16xf32>
      %108 = vector.extract_strided_slice %101 {offsets = [16, 0], sizes = [16, 16], strides = [1, 1]} : vector<48x16xf32> to vector<16x16xf32>
      %109 = vector.extract_strided_slice %102 {offsets = [16, 0], sizes = [16, 16], strides = [1, 1]} : vector<48x16xf32> to vector<16x16xf32>
      %cst_39 = arith.constant dense<0.000000e+00> : vector<16x16xf32>
      %110 = tpu.matmul %108, %109, %cst_39 {dimension_numbers = #tpu.dot_dimension_numbers<[1], [0], [0], [1], [0, 0, 1, 1], [], []>} : vector<16x16xf32>, vector<16x16xf32>, vector<16x16xf32> -> vector<16x16xf32>
      %111 = arith.addf %107, %110 : vector<16x16xf32>
      %112 = vector.extract_strided_slice %101 {offsets = [32, 0], sizes = [16, 16], strides = [1, 1]} : vector<48x16xf32> to vector<16x16xf32>
      %113 = vector.extract_strided_slice %102 {offsets = [32, 0], sizes = [16, 16], strides = [1, 1]} : vector<48x16xf32> to vector<16x16xf32>
      %cst_40 = arith.constant dense<0.000000e+00> : vector<16x16xf32>
      %114 = tpu.matmul %112, %113, %cst_40 {dimension_numbers = #tpu.dot_dimension_numbers<[1], [0], [0], [1], [0, 0, 1, 1], [], []>} : vector<16x16xf32>, vector<16x16xf32>, vector<16x16xf32> -> vector<16x16xf32>
      %115 = arith.addf %111, %114 : vector<16x16xf32>
      %cst_41 = arith.constant 5.000000e-01 : f32
      %116 = vector.broadcast %cst_41 : f32 to vector<16x16xf32>
      %117 = arith.mulf %116, %115 : vector<16x16xf32>
      %cst_42 = arith.constant 4.471500e-02 : f32
      %118 = vector.broadcast %cst_42 : f32 to vector<16x16xf32>
      %119 = arith.mulf %118, %115 : vector<16x16xf32>
      %120 = arith.mulf %119, %115 : vector<16x16xf32>
      %121 = arith.mulf %120, %115 : vector<16x16xf32>
      %122 = arith.addf %115, %121 : vector<16x16xf32>
      %cst_43 = arith.constant 0.797884583 : f32
      %123 = vector.broadcast %cst_43 : f32 to vector<16x16xf32>
      %124 = arith.mulf %123, %122 : vector<16x16xf32>
      %125 = math.tanh %124 : vector<16x16xf32>
      %cst_44 = arith.constant 1.000000e+00 : f32
      %126 = vector.broadcast %cst_44 : f32 to vector<16x16xf32>
      %127 = arith.addf %126, %125 : vector<16x16xf32>
      %128 = arith.mulf %117, %127 : vector<16x16xf32>
      %cst_45 = arith.constant dense<0.000000e+00> : vector<16xf32>
      %129 = vector.multi_reduction <add>, %128, %cst_45 [1] : vector<16x16xf32> to vector<16xf32>
      %130 = vector.shape_cast %129 : vector<16xf32> to vector<16x1xf32>
      %cst_46 = arith.constant 1.600000e+01 : f32
      %131 = vector.broadcast %cst_46 : f32 to vector<16x1xf32>
      %132 = arith.divf %130, %131 : vector<16x1xf32>
      %133 = vector.broadcast %132 : vector<16x1xf32> to vector<16x16xf32>
      %134 = arith.subf %128, %133 : vector<16x16xf32>
      %135 = arith.mulf %134, %134 : vector<16x16xf32>
      %cst_47 = arith.constant dense<0.000000e+00> : vector<16xf32>
      %136 = vector.multi_reduction <add>, %135, %cst_47 [1] : vector<16x16xf32> to vector<16xf32>
      %137 = vector.shape_cast %136 : vector<16xf32> to vector<16x1xf32>
      %cst_48 = arith.constant 1.600000e+01 : f32
      %138 = vector.broadcast %cst_48 : f32 to vector<16x1xf32>
      %139 = arith.divf %137, %138 : vector<16x1xf32>
      %140 = vector.broadcast %132 : vector<16x1xf32> to vector<16x16xf32>
      %141 = arith.subf %128, %140 : vector<16x16xf32>
      %cst_49 = arith.constant 9.99999974E-6 : f32
      %142 = vector.broadcast %cst_49 : f32 to vector<16x1xf32>
      %143 = arith.addf %139, %142 : vector<16x1xf32>
      %144 = math.rsqrt %143 : vector<16x1xf32>
      %145 = vector.broadcast %144 : vector<16x1xf32> to vector<16x16xf32>
      %146 = arith.mulf %141, %145 : vector<16x16xf32>
      %147 = vector.broadcast %17 : vector<1x16xf32> to vector<16x16xf32>
      %148 = arith.mulf %146, %147 : vector<16x16xf32>
      %149 = vector.broadcast %18 : vector<1x16xf32> to vector<16x16xf32>
      %150 = arith.addf %148, %149 : vector<16x16xf32>
      %c216 = arith.constant 216 : index
      %c0_50 = arith.constant 0 : index
      %151 = vector.load %arg3[%c216, %c0_50] : memref<568x128xf32, #tpu.memory_space<vmem>>, vector<16x32xf32>
      %cst_51 = arith.constant dense<0.000000e+00> : vector<16x32xf32>
      %152 = tpu.matmul %150, %151, %cst_51 {dimension_numbers = #tpu.dot_dimension_numbers<[1], [0], [0], [1], [0, 0, 1, 1], [], []>} : vector<16x16xf32>, vector<16x32xf32>, vector<16x32xf32> -> vector<16x32xf32>
      %153 = vector.broadcast %19 : vector<1x32xf32> to vector<16x32xf32>
      %154 = arith.addf %152, %153 : vector<16x32xf32>
      %c88 = arith.constant 88 : index
      %c0_52 = arith.constant 0 : index
      %155 = vector.load %arg3[%c88, %c0_52] : memref<568x128xf32, #tpu.memory_space<vmem>>, vector<64x16xf32>
      %c232 = arith.constant 232 : index
      %c0_53 = arith.constant 0 : index
      %156 = vector.load %arg3[%c232, %c0_53] : memref<568x128xf32, #tpu.memory_space<vmem>>, vector<128x32xf32>
      %157 = vector.extract_strided_slice %155 {offsets = [0, 0], sizes = [16, 16], strides = [1, 1]} : vector<64x16xf32> to vector<16x16xf32>
      %cst_54 = arith.constant dense<0.000000e+00> : vector<16x32xf32>
      %158 = tpu.matmul %157, %154, %cst_54 {dimension_numbers = #tpu.dot_dimension_numbers<[1], [0], [0], [1], [0, 0, 1, 1], [], []>} : vector<16x16xf32>, vector<16x32xf32>, vector<16x32xf32> -> vector<16x32xf32>
      %159 = vector.extract_strided_slice %156 {offsets = [0, 0], sizes = [32, 32], strides = [1, 1]} : vector<128x32xf32> to vector<32x32xf32>
      %cst_55 = arith.constant dense<0.000000e+00> : vector<16x32xf32>
      %160 = tpu.matmul %158, %159, %cst_55 {dimension_numbers = #tpu.dot_dimension_numbers<[1], [0], [0], [1], [0, 0, 1, 1], [], []>} : vector<16x32xf32>, vector<32x32xf32>, vector<16x32xf32> -> vector<16x32xf32>
      %161 = vector.broadcast %20 : vector<1x32xf32> to vector<16x32xf32>
      %162 = arith.addf %161, %160 : vector<16x32xf32>
      %163 = vector.extract_strided_slice %155 {offsets = [16, 0], sizes = [16, 16], strides = [1, 1]} : vector<64x16xf32> to vector<16x16xf32>
      %cst_56 = arith.constant dense<0.000000e+00> : vector<16x32xf32>
      %164 = tpu.matmul %163, %154, %cst_56 {dimension_numbers = #tpu.dot_dimension_numbers<[1], [0], [0], [1], [0, 0, 1, 1], [], []>} : vector<16x16xf32>, vector<16x32xf32>, vector<16x32xf32> -> vector<16x32xf32>
      %165 = vector.extract_strided_slice %156 {offsets = [32, 0], sizes = [32, 32], strides = [1, 1]} : vector<128x32xf32> to vector<32x32xf32>
      %cst_57 = arith.constant dense<0.000000e+00> : vector<16x32xf32>
      %166 = tpu.matmul %164, %165, %cst_57 {dimension_numbers = #tpu.dot_dimension_numbers<[1], [0], [0], [1], [0, 0, 1, 1], [], []>} : vector<16x32xf32>, vector<32x32xf32>, vector<16x32xf32> -> vector<16x32xf32>
      %167 = arith.addf %162, %166 : vector<16x32xf32>
      %168 = vector.extract_strided_slice %155 {offsets = [32, 0], sizes = [16, 16], strides = [1, 1]} : vector<64x16xf32> to vector<16x16xf32>
      %cst_58 = arith.constant dense<0.000000e+00> : vector<16x32xf32>
      %169 = tpu.matmul %168, %154, %cst_58 {dimension_numbers = #tpu.dot_dimension_numbers<[1], [0], [0], [1], [0, 0, 1, 1], [], []>} : vector<16x16xf32>, vector<16x32xf32>, vector<16x32xf32> -> vector<16x32xf32>
      %170 = vector.extract_strided_slice %156 {offsets = [64, 0], sizes = [32, 32], strides = [1, 1]} : vector<128x32xf32> to vector<32x32xf32>
      %cst_59 = arith.constant dense<0.000000e+00> : vector<16x32xf32>
      %171 = tpu.matmul %169, %170, %cst_59 {dimension_numbers = #tpu.dot_dimension_numbers<[1], [0], [0], [1], [0, 0, 1, 1], [], []>} : vector<16x32xf32>, vector<32x32xf32>, vector<16x32xf32> -> vector<16x32xf32>
      %172 = arith.addf %167, %171 : vector<16x32xf32>
      %173 = vector.extract_strided_slice %155 {offsets = [48, 0], sizes = [16, 16], strides = [1, 1]} : vector<64x16xf32> to vector<16x16xf32>
      %cst_60 = arith.constant dense<0.000000e+00> : vector<16x32xf32>
      %174 = tpu.matmul %173, %154, %cst_60 {dimension_numbers = #tpu.dot_dimension_numbers<[1], [0], [0], [1], [0, 0, 1, 1], [], []>} : vector<16x16xf32>, vector<16x32xf32>, vector<16x32xf32> -> vector<16x32xf32>
      %175 = vector.extract_strided_slice %156 {offsets = [96, 0], sizes = [32, 32], strides = [1, 1]} : vector<128x32xf32> to vector<32x32xf32>
      %cst_61 = arith.constant dense<0.000000e+00> : vector<16x32xf32>
      %176 = tpu.matmul %174, %175, %cst_61 {dimension_numbers = #tpu.dot_dimension_numbers<[1], [0], [0], [1], [0, 0, 1, 1], [], []>} : vector<16x32xf32>, vector<32x32xf32>, vector<16x32xf32> -> vector<16x32xf32>
      %177 = arith.addf %172, %176 : vector<16x32xf32>
      %cst_62 = arith.constant 5.000000e-01 : f32
      %178 = vector.broadcast %cst_62 : f32 to vector<16x32xf32>
      %179 = arith.mulf %178, %177 : vector<16x32xf32>
      %cst_63 = arith.constant 4.471500e-02 : f32
      %180 = vector.broadcast %cst_63 : f32 to vector<16x32xf32>
      %181 = arith.mulf %180, %177 : vector<16x32xf32>
      %182 = arith.mulf %181, %177 : vector<16x32xf32>
      %183 = arith.mulf %182, %177 : vector<16x32xf32>
      %184 = arith.addf %177, %183 : vector<16x32xf32>
      %cst_64 = arith.constant 0.797884583 : f32
      %185 = vector.broadcast %cst_64 : f32 to vector<16x32xf32>
      %186 = arith.mulf %185, %184 : vector<16x32xf32>
      %187 = math.tanh %186 : vector<16x32xf32>
      %cst_65 = arith.constant 1.000000e+00 : f32
      %188 = vector.broadcast %cst_65 : f32 to vector<16x32xf32>
      %189 = arith.addf %188, %187 : vector<16x32xf32>
      %190 = arith.mulf %179, %189 : vector<16x32xf32>
      %191 = arith.addf %154, %190 : vector<16x32xf32>
      %cst_66 = arith.constant dense<0.000000e+00> : vector<16xf32>
      %192 = vector.multi_reduction <add>, %191, %cst_66 [1] : vector<16x32xf32> to vector<16xf32>
      %193 = vector.shape_cast %192 : vector<16xf32> to vector<16x1xf32>
      %cst_67 = arith.constant 3.200000e+01 : f32
      %194 = vector.broadcast %cst_67 : f32 to vector<16x1xf32>
      %195 = arith.divf %193, %194 : vector<16x1xf32>
      %196 = vector.broadcast %195 : vector<16x1xf32> to vector<16x32xf32>
      %197 = arith.subf %191, %196 : vector<16x32xf32>
      %198 = arith.mulf %197, %197 : vector<16x32xf32>
      %cst_68 = arith.constant dense<0.000000e+00> : vector<16xf32>
      %199 = vector.multi_reduction <add>, %198, %cst_68 [1] : vector<16x32xf32> to vector<16xf32>
      %200 = vector.shape_cast %199 : vector<16xf32> to vector<16x1xf32>
      %cst_69 = arith.constant 3.200000e+01 : f32
      %201 = vector.broadcast %cst_69 : f32 to vector<16x1xf32>
      %202 = arith.divf %200, %201 : vector<16x1xf32>
      %203 = vector.broadcast %195 : vector<16x1xf32> to vector<16x32xf32>
      %204 = arith.subf %191, %203 : vector<16x32xf32>
      %cst_70 = arith.constant 9.99999974E-6 : f32
      %205 = vector.broadcast %cst_70 : f32 to vector<16x1xf32>
      %206 = arith.addf %202, %205 : vector<16x1xf32>
      %207 = math.rsqrt %206 : vector<16x1xf32>
      %208 = vector.broadcast %207 : vector<16x1xf32> to vector<16x32xf32>
      %209 = arith.mulf %204, %208 : vector<16x32xf32>
      %210 = vector.broadcast %21 : vector<1x32xf32> to vector<16x32xf32>
      %211 = arith.mulf %209, %210 : vector<16x32xf32>
      %212 = vector.broadcast %22 : vector<1x32xf32> to vector<16x32xf32>
      %213 = arith.addf %211, %212 : vector<16x32xf32>
      %c0_71 = arith.constant 0 : index
      %c0_72 = arith.constant 0 : index
      %214 = vector.load %arg6[%c0_71, %c0_72] : memref<16x32xf32, #tpu.memory_space<vmem>>, vector<16x32xf32>
      tpu.vector_store %arg6[%c0_71, %c0_72], %213 {strides = array<i32>} : memref<16x32xf32, #tpu.memory_space<vmem>>, vector<16x32xf32>,
    } else {
    }
    %c0_i32_1 = arith.constant 0 : i32
    %3 = arith.cmpi sgt, %arg1, %c0_i32_1 : i32
    %4 = arith.extui %3 : i1 to i32
    %c0_i32_2 = arith.constant 0 : i32
    %5 = arith.cmpi ne, %4, %c0_i32_2 : i32
    scf.if %5 {
      %c0_8 = arith.constant 0 : index
      %c0_9 = arith.constant 0 : index
      %12 = vector.load %arg6[%c0_8, %c0_9] : memref<16x32xf32, #tpu.memory_space<vmem>>, vector<16x32xf32>
      %c0_10 = arith.constant 0 : index
      %c160 = arith.constant 160 : index
      %c0_11 = arith.constant 0 : index
      %13 = vector.load %arg4[%c0_10, %c160, %c0_11] : memref<1x168x128xf32, #tpu.memory_space<vmem>>, vector<1x8x128xf32>
      %14 = vector.shape_cast %13 : vector<1x8x128xf32> to vector<8x128xf32>
      %15 = vector.extract_strided_slice %14 {offsets = [0, 0], sizes = [1, 128], strides = [1, 1]} : vector<8x128xf32> to vector<1x128xf32>
      %16 = vector.extract_strided_slice %14 {offsets = [1, 0], sizes = [1, 32], strides = [1, 1]} : vector<8x128xf32> to vector<1x32xf32>
      %17 = vector.extract_strided_slice %14 {offsets = [2, 0], sizes = [1, 32], strides = [1, 1]} : vector<8x128xf32> to vector<1x32xf32>
      %18 = vector.extract_strided_slice %14 {offsets = [3, 0], sizes = [1, 32], strides = [1, 1]} : vector<8x128xf32> to vector<1x32xf32>
      %19 = vector.extract_strided_slice %14 {offsets = [4, 0], sizes = [1, 64], strides = [1, 1]} : vector<8x128xf32> to vector<1x64xf32>
      %20 = vector.extract_strided_slice %14 {offsets = [5, 0], sizes = [1, 32], strides = [1, 1]} : vector<8x128xf32> to vector<1x32xf32>
      %21 = vector.extract_strided_slice %14 {offsets = [6, 0], sizes = [1, 32], strides = [1, 1]} : vector<8x128xf32> to vector<1x32xf32>
      %22 = vector.extract_strided_slice %14 {offsets = [7, 0], sizes = [1, 32], strides = [1, 1]} : vector<8x128xf32> to vector<1x32xf32>
      %c376 = arith.constant 376 : index
      %c0_12 = arith.constant 0 : index
      %23 = vector.load %arg3[%c376, %c0_12] : memref<568x128xf32, #tpu.memory_space<vmem>>, vector<64x16xf32>
      %c440 = arith.constant 440 : index
      %c0_13 = arith.constant 0 : index
      %24 = vector.load %arg3[%c440, %c0_13] : memref<568x128xf32, #tpu.memory_space<vmem>>, vector<64x32xf32>
      %c504 = arith.constant 504 : index
      %c0_14 = arith.constant 0 : index
      %25 = vector.load %arg3[%c504, %c0_14] : memref<568x128xf32, #tpu.memory_space<vmem>>, vector<64x64xf32>
      %c0_15 = arith.constant 0 : index
      %c0_16 = arith.constant 0 : index
      %c0_17 = arith.constant 0 : index
      %26 = vector.load %arg4[%c0_15, %c0_16, %c0_17] : memref<1x168x128xf32, #tpu.memory_space<vmem>>, vector<1x32x128xf32>
      %27 = vector.shape_cast %26 : vector<1x32x128xf32> to vector<32x128xf32>
      %cst_18 = arith.constant dense<0.000000e+00> : vector<16x128xf32>
      %28 = tpu.matmul %12, %27, %cst_18 {dimension_numbers = #tpu.dot_dimension_numbers<[1], [0], [0], [1], [0, 0, 1, 1], [], []>} : vector<16x32xf32>, vector<32x128xf32>, vector<16x128xf32> -> vector<16x128xf32>
      %29 = vector.broadcast %15 : vector<1x128xf32> to vector<16x128xf32>
      %30 = arith.addf %28, %29 : vector<16x128xf32>
      %31 = vector.extract_strided_slice %30 {offsets = [0, 0], sizes = [16, 32], strides = [1, 1]} : vector<16x128xf32> to vector<16x32xf32>
      %32 = vector.extract_strided_slice %30 {offsets = [0, 32], sizes = [16, 32], strides = [1, 1]} : vector<16x128xf32> to vector<16x32xf32>
      %33 = vector.extract_strided_slice %30 {offsets = [0, 64], sizes = [16, 32], strides = [1, 1]} : vector<16x128xf32> to vector<16x32xf32>
      %cst_19 = arith.constant dense<0.000000e+00> : vector<64x32xf32>
      %34 = tpu.matmul %23, %32, %cst_19 {dimension_numbers = #tpu.dot_dimension_numbers<[1], [0], [0], [1], [0, 0, 1, 1], [], []>} : vector<64x16xf32>, vector<16x32xf32>, vector<64x32xf32> -> vector<64x32xf32>
      %35 = arith.mulf %34, %24 : vector<64x32xf32>
      %cst_20 = arith.constant dense<0.000000e+00> : vector<64x32xf32>
      %36 = tpu.matmul %23, %33, %cst_20 {dimension_numbers = #tpu.dot_dimension_numbers<[1], [0], [0], [1], [0, 0, 1, 1], [], []>} : vector<64x16xf32>, vector<16x32xf32>, vector<64x32xf32> -> vector<64x32xf32>
      %37 = arith.mulf %36, %24 : vector<64x32xf32>
      %cst_21 = arith.constant dense<0.000000e+00> : vector<16x64xf32>
      %38 = tpu.matmul %31, %35, %cst_21 {dimension_numbers = #tpu.dot_dimension_numbers<[1], [1], [0], [0], [0, 0, 1, 0], [], []>} : vector<16x32xf32>, vector<64x32xf32>, vector<16x64xf32> -> vector<16x64xf32>
      %cst_22 = arith.constant 0.353553385 : f32
      %39 = vector.broadcast %cst_22 : f32 to vector<16x64xf32>
      %40 = arith.mulf %38, %39 : vector<16x64xf32>
      %cst_23 = arith.constant dense<0xFF800000> : vector<16xf32>
      %41 = vector.multi_reduction <maximumf>, %40, %cst_23 [1] : vector<16x64xf32> to vector<16xf32>
      %42 = vector.shape_cast %41 : vector<16xf32> to vector<16x1xf32>
      %43 = vector.broadcast %42 : vector<16x1xf32> to vector<16x64xf32>
      %44 = arith.subf %40, %43 : vector<16x64xf32>
      %45 = math.exp %44 : vector<16x64xf32>
      %cst_24 = arith.constant dense<0.000000e+00> : vector<16x64xf32>
      %46 = tpu.matmul %45, %25, %cst_24 {dimension_numbers = #tpu.dot_dimension_numbers<[1], [0], [0], [1], [0, 0, 1, 1], [], []>} : vector<16x64xf32>, vector<64x64xf32>, vector<16x64xf32> -> vector<16x64xf32>
      %47 = tpu.reciprocal %46 {approx = true} : vector<16x64xf32> -> vector<16x64xf32>
      %48 = arith.mulf %45, %47 : vector<16x64xf32>
      %cst_25 = arith.constant dense<0.000000e+00> : vector<16x32xf32>
      %49 = tpu.matmul %48, %37, %cst_25 {dimension_numbers = #tpu.dot_dimension_numbers<[1], [0], [0], [1], [0, 0, 1, 1], [], []>} : vector<16x64xf32>, vector<64x32xf32>, vector<16x32xf32> -> vector<16x32xf32>
      %c0_26 = arith.constant 0 : index
      %c32 = arith.constant 32 : index
      %c0_27 = arith.constant 0 : index
      %50 = vector.load %arg4[%c0_26, %c32, %c0_27] : memref<1x168x128xf32, #tpu.memory_space<vmem>>, vector<1x32x32xf32>
      %51 = vector.shape_cast %50 : vector<1x32x32xf32> to vector<32x32xf32>
      %cst_28 = arith.constant dense<0.000000e+00> : vector<16x32xf32>
      %52 = tpu.matmul %49, %51, %cst_28 {dimension_numbers = #tpu.dot_dimension_numbers<[1], [0], [0], [1], [0, 0, 1, 1], [], []>} : vector<16x32xf32>, vector<32x32xf32>, vector<16x32xf32> -> vector<16x32xf32>
      %53 = vector.broadcast %16 : vector<1x32xf32> to vector<16x32xf32>
      %54 = arith.addf %52, %53 : vector<16x32xf32>
      %55 = arith.addf %54, %12 : vector<16x32xf32>
      %cst_29 = arith.constant dense<0.000000e+00> : vector<16xf32>
      %56 = vector.multi_reduction <add>, %55, %cst_29 [1] : vector<16x32xf32> to vector<16xf32>
      %57 = vector.shape_cast %56 : vector<16xf32> to vector<16x1xf32>
      %cst_30 = arith.constant 3.200000e+01 : f32
      %58 = vector.broadcast %cst_30 : f32 to vector<16x1xf32>
      %59 = arith.divf %57, %58 : vector<16x1xf32>
      %60 = vector.broadcast %59 : vector<16x1xf32> to vector<16x32xf32>
      %61 = arith.subf %55, %60 : vector<16x32xf32>
      %62 = arith.mulf %61, %61 : vector<16x32xf32>
      %cst_31 = arith.constant dense<0.000000e+00> : vector<16xf32>
      %63 = vector.multi_reduction <add>, %62, %cst_31 [1] : vector<16x32xf32> to vector<16xf32>
      %64 = vector.shape_cast %63 : vector<16xf32> to vector<16x1xf32>
      %cst_32 = arith.constant 3.200000e+01 : f32
      %65 = vector.broadcast %cst_32 : f32 to vector<16x1xf32>
      %66 = arith.divf %64, %65 : vector<16x1xf32>
      %67 = vector.broadcast %59 : vector<16x1xf32> to vector<16x32xf32>
      %68 = arith.subf %55, %67 : vector<16x32xf32>
      %cst_33 = arith.constant 9.99999974E-6 : f32
      %69 = vector.broadcast %cst_33 : f32 to vector<16x1xf32>
      %70 = arith.addf %66, %69 : vector<16x1xf32>
      %71 = math.rsqrt %70 : vector<16x1xf32>
      %72 = vector.broadcast %71 : vector<16x1xf32> to vector<16x32xf32>
      %73 = arith.mulf %68, %72 : vector<16x32xf32>
      %74 = vector.broadcast %17 : vector<1x32xf32> to vector<16x32xf32>
      %75 = arith.mulf %73, %74 : vector<16x32xf32>
      %76 = vector.broadcast %18 : vector<1x32xf32> to vector<16x32xf32>
      %77 = arith.addf %75, %76 : vector<16x32xf32>
      %c0_34 = arith.constant 0 : index
      %c64 = arith.constant 64 : index
      %c0_35 = arith.constant 0 : index
      %78 = vector.load %arg4[%c0_34, %c64, %c0_35] : memref<1x168x128xf32, #tpu.memory_space<vmem>>, vector<1x32x64xf32>
      %79 = vector.shape_cast %78 : vector<1x32x64xf32> to vector<32x64xf32>
      %cst_36 = arith.constant dense<0.000000e+00> : vector<16x64xf32>
      %80 = tpu.matmul %77, %79, %cst_36 {dimension_numbers = #tpu.dot_dimension_numbers<[1], [0], [0], [1], [0, 0, 1, 1], [], []>} : vector<16x32xf32>, vector<32x64xf32>, vector<16x64xf32> -> vector<16x64xf32>
      %81 = vector.broadcast %19 : vector<1x64xf32> to vector<16x64xf32>
      %82 = arith.addf %80, %81 : vector<16x64xf32>
      %cst_37 = arith.constant 5.000000e-01 : f32
      %83 = vector.broadcast %cst_37 : f32 to vector<16x64xf32>
      %84 = arith.mulf %83, %82 : vector<16x64xf32>
      %cst_38 = arith.constant 4.471500e-02 : f32
      %85 = vector.broadcast %cst_38 : f32 to vector<16x64xf32>
      %86 = arith.mulf %85, %82 : vector<16x64xf32>
      %87 = arith.mulf %86, %82 : vector<16x64xf32>
      %88 = arith.mulf %87, %82 : vector<16x64xf32>
      %89 = arith.addf %82, %88 : vector<16x64xf32>
      %cst_39 = arith.constant 0.797884583 : f32
      %90 = vector.broadcast %cst_39 : f32 to vector<16x64xf32>
      %91 = arith.mulf %90, %89 : vector<16x64xf32>
      %92 = math.tanh %91 : vector<16x64xf32>
      %cst_40 = arith.constant 1.000000e+00 : f32
      %93 = vector.broadcast %cst_40 : f32 to vector<16x64xf32>
      %94 = arith.addf %93, %92 : vector<16x64xf32>
      %95 = arith.mulf %84, %94 : vector<16x64xf32>
      %c0_41 = arith.constant 0 : index
      %c96 = arith.constant 96 : index
      %c0_42 = arith.constant 0 : index
      %96 = vector.load %arg4[%c0_41, %c96, %c0_42] : memref<1x168x128xf32, #tpu.memory_space<vmem>>, vector<1x64x32xf32>
      %97 = vector.shape_cast %96 : vector<1x64x32xf32> to vector<64x32xf32>
      %cst_43 = arith.constant dense<0.000000e+00> : vector<16x32xf32>
      %98 = tpu.matmul %95, %97, %cst_43 {dimension_numbers = #tpu.dot_dimension_numbers<[1], [0], [0], [1], [0, 0, 1, 1], [], []>} : vector<16x64xf32>, vector<64x32xf32>, vector<16x32xf32> -> vector<16x32xf32>
      %99 = vector.broadcast %20 : vector<1x32xf32> to vector<16x32xf32>
      %100 = arith.addf %98, %99 : vector<16x32xf32>
      %101 = arith.addf %100, %77 : vector<16x32xf32>
      %cst_44 = arith.constant dense<0.000000e+00> : vector<16xf32>
      %102 = vector.multi_reduction <add>, %101, %cst_44 [1] : vector<16x32xf32> to vector<16xf32>
      %103 = vector.shape_cast %102 : vector<16xf32> to vector<16x1xf32>
      %cst_45 = arith.constant 3.200000e+01 : f32
      %104 = vector.broadcast %cst_45 : f32 to vector<16x1xf32>
      %105 = arith.divf %103, %104 : vector<16x1xf32>
      %106 = vector.broadcast %105 : vector<16x1xf32> to vector<16x32xf32>
      %107 = arith.subf %101, %106 : vector<16x32xf32>
      %108 = arith.mulf %107, %107 : vector<16x32xf32>
      %cst_46 = arith.constant dense<0.000000e+00> : vector<16xf32>
      %109 = vector.multi_reduction <add>, %108, %cst_46 [1] : vector<16x32xf32> to vector<16xf32>
      %110 = vector.shape_cast %109 : vector<16xf32> to vector<16x1xf32>
      %cst_47 = arith.constant 3.200000e+01 : f32
      %111 = vector.broadcast %cst_47 : f32 to vector<16x1xf32>
      %112 = arith.divf %110, %111 : vector<16x1xf32>
      %113 = vector.broadcast %105 : vector<16x1xf32> to vector<16x32xf32>
      %114 = arith.subf %101, %113 : vector<16x32xf32>
      %cst_48 = arith.constant 9.99999974E-6 : f32
      %115 = vector.broadcast %cst_48 : f32 to vector<16x1xf32>
      %116 = arith.addf %112, %115 : vector<16x1xf32>
      %117 = math.rsqrt %116 : vector<16x1xf32>
      %118 = vector.broadcast %117 : vector<16x1xf32> to vector<16x32xf32>
      %119 = arith.mulf %114, %118 : vector<16x32xf32>
      %120 = vector.broadcast %21 : vector<1x32xf32> to vector<16x32xf32>
      %121 = arith.mulf %119, %120 : vector<16x32xf32>
      %122 = vector.broadcast %22 : vector<1x32xf32> to vector<16x32xf32>
      %123 = arith.addf %121, %122 : vector<16x32xf32>
      %c0_49 = arith.constant 0 : index
      %c0_50 = arith.constant 0 : index
      %124 = vector.load %arg6[%c0_49, %c0_50] : memref<16x32xf32, #tpu.memory_space<vmem>>, vector<16x32xf32>
      tpu.vector_store %arg6[%c0_49, %c0_50], %123 {strides = array<i32>} : memref<16x32xf32, #tpu.memory_space<vmem>>, vector<16x32xf32>,
    } else {
    }
    %c0 = arith.constant 0 : index
    %c0_3 = arith.constant 0 : index
    %6 = vector.load %arg6[%c0, %c0_3] : memref<16x32xf32, #tpu.memory_space<vmem>>, vector<16x32xf32>
    %cst = arith.constant 0.000000e+00 : f32
    %7 = vector.broadcast %cst : f32 to vector<16x96xf32>
    %8 = tpu.concatenate %6, %7 in 1 : vector<16x32xf32>, vector<16x96xf32> -> vector<16x128xf32>
    %c0_4 = arith.constant 0 : index
    %c0_5 = arith.constant 0 : index
    %c0_6 = arith.constant 0 : index
    %c0_7 = arith.constant 0 : index
    %9 = vector.load %arg5[%c0_4, %c0_5, %c0_6, %c0_7] : memref<1x1x16x128xf32, #tpu.memory_space<vmem>>, vector<1x1x16x128xf32>
    %10 = vector.shape_cast %9 : vector<1x1x16x128xf32> to vector<16x128xf32>
    %11 = vector.shape_cast %8 : vector<16x128xf32> to vector<1x1x16x128xf32>
    tpu.vector_store %arg5[%c0_4, %c0_5, %c0_6, %c0_7], %11 {strides = array<i32>} : memref<1x1x16x128xf32, #tpu.memory_space<vmem>>, vector<1x1x16x128xf32>,
    return
  }
  func.func @transform_0(%arg0: i32, %arg1: i32) -> (i32, i32, i32) {
    %c0_i32 = arith.constant 0 : i32
    %c0_i32_0 = arith.constant 0 : i32
    %c0_i32_1 = arith.constant 0 : i32
    return %arg0, %c0_i32, %c0_i32_0 : i32, i32, i32
  }
  func.func @transform_1(%arg0: i32, %arg1: i32) -> (i32, i32) {
    %c0_i32 = arith.constant 0 : i32
    %c0_i32_0 = arith.constant 0 : i32
    %c0_i32_1 = arith.constant 0 : i32
    return %c0_i32, %c0_i32_0 : i32, i32
  }
  func.func @transform_2(%arg0: i32, %arg1: i32) -> (i32, i32, i32) {
    %c1_i32 = arith.constant 1 : i32
    %0 = arith.subi %arg1, %c1_i32 : i32
    %c0_i32 = arith.constant 0 : i32
    %1 = arith.maxsi %0, %c0_i32 : i32
    %c0_i32_0 = arith.constant 0 : i32
    %c0_i32_1 = arith.constant 0 : i32
    %c0_i32_2 = arith.constant 0 : i32
    return %1, %c0_i32_0, %c0_i32_1 : i32, i32, i32
  }
  func.func @transform_3(%arg0: i32, %arg1: i32) -> (i32, i32, i32, i32) {
    %c0_i32 = arith.constant 0 : i32
    %c0_i32_0 = arith.constant 0 : i32
    %c0_i32_1 = arith.constant 0 : i32
    return %arg1, %arg0, %c0_i32, %c0_i32_0 : i32, i32, i32, i32
  }
}

</mosaic_0001>

<llo_original>
// kernel: mert_apply.1
$region0: #{mert_apply.1}
  #allocation0 [shape = 'u32[]', space=smem, size = 0x4, offset = 0x4, fixed_abs, tag = 'smem constant byte address 0x4 - core index']
  #allocation1 [shape = 'u32[72,128]{1,0:T(1,128)}', space=vmem, size = 0x9000, scoped, tag = 'internal scratch']
  #allocation2 [shape = 'f32[16,32]{1,0:T(8,128)}', space=vmem, size = 0x2000, scoped, tag = 'scratch operand']
  %s0 = inlined_call_operand.vmem [shape: f32[2,40,8], index: 0, kind: input, shape index: {}]
  %s1 = inlined_call_operand.hbm [shape: f32[568,128], index: 1, kind: input, shape index: {}]
  %s2 = inlined_call_operand.hbm [shape: f32[2,168,128], index: 2, kind: input, shape index: {}]
  %s3 = inlined_call_operand.vmem [shape: f32[3,2,16,128], index: 3, kind: output, shape index: {}]
  %s4 = sld [smem:[#allocation0]]
  $region61: #{mert_apply.1} parent=0
    _
  %s6 = ssub.s32 1, %s4
  %s7 = scalar_select 0, %s6, %s4
  $region1: #{mert_apply.1} parent=0
    #allocation3 [shape = 'u8[290816]{0}', space=vmem, size = 0x47000, scoped, tag = 'input window, operand 1, single buffered']
    #allocation4 [shape = 's32[2]{0}', space=sflag, size = 0x8, scoped, tag = 'scoped memory for mert_apply.1']
    #allocation5 [shape = 'u8[172032]{0}', space=vmem, size = 0x2a000, scoped, tag = 'input window, operand 2']
    #allocation6 [shape = 's32[2]{0}', space=sflag, size = 0x8, scoped, tag = 'scoped memory for mert_apply.1']
    %8 = vsyncpa [#allocation4], 0
    %9 = vsyncpa [#allocation6], 0
    %s10 = scalar_lea.sflag [#allocation6], 1
    %11 = vsyncpa %s10, 0
    loop: start=0, step=1, limit=8
    $region2: #{mert_apply.1} parent=1 // loop_pre_header
      _
    $region3: #{mert_apply.1} parent=1 // loop_header
      %s13 = sphi 0, %s17
      %p14 = scmp.ge.s32.totalorder %s13, 8
      %s20 = sphi 0, %s32
      %s21 = sphi 0, %s28
      %s22 = sphi 0, %s20
      %s23 = sphi 0, %s21
      %s24 = sphi 0, %s22
      %s25 = sphi 0, %s23
      %s35 = sphi 0, %s37
      %s38 = sphi 0, %s35
      %s39 = sphi 0, %s38
      %s55 = sphi 0, %s39
      %s59 = sphi 0, %s59
      %s61 = sphi 0, %s59
      %s62 = sphi 0, %s61
      %s76 = sphi 0, %s62
      %s88 = sphi 0, %s90
      %s91 = sphi 0, %s88
      %s92 = sphi 0, %s91
      %s108 = sphi 0, %s92
      %s116 = sphi 0, %s118
      %s119 = sphi 0, %s116
      %s120 = sphi 0, %s119
      %s136 = sphi 0, %s120
    $region4: #{mert_apply.1} parent=1 // loop_header_branch
      %16 = sbr.rel (%p14) target = $region8
    $region5: #{mert_apply.1} parent=1 // loop_body
      %s18 = ssub.s32 %s13, 1
      %s19 = ssub.s32 %s13, 2
      %s26 = sadd.s32 1, %s21
      %p27 = scmp.ge.s32.totalorder %s26, 3
      %s28 = scalar_select %p27, 0, %s26
      %s29 = sadd.s32 1, %s20
      %s30 = scalar_select %p27, %s29, %s20
      %p31 = scmp.ge.s32.totalorder %s30, 2
      %s32 = scalar_select %p31, 0, %s30
      %s33 = ssub.s32 %s20, %s32
      %p34 = scmp.eq.s32.totalorder %s33, 0
      %s36 = sadd.s32 %s35, 1
      %s37 = scalar_select %p34, %s35, %s36
      %p40 = pneg %p34
      %p41 = scmp.eq.s32.totalorder %s13, 5
      %p42 = por %p40, %p41
      %p43 = scmp.ne.s32.totalorder %s35, %s38
      %p44 = scmp.eq.s32.totalorder %s13, 0
      %p45 = por %p43, %p44
      %p46 = scmp.ne.s32.totalorder %s35, %s38
      %p47 = scmp.eq.s32.totalorder %s18, 5
      %p48 = por %p46, %p47
      %p49 = scmp.ne.s32.totalorder %s38, %s39
      %p50 = scmp.eq.s32.totalorder %s18, 0
      %p51 = por %p49, %p50
      %p52 = scmp.ne.s32.totalorder %s38, %s39
      %p53 = scmp.eq.s32.totalorder %s19, 5
      %p54 = por %p52, %p53
      %p56 = scmp.ne.s32.totalorder %s39, %s55
      %p57 = scmp.eq.s32.totalorder %s19, 0
      %p58 = por %p56, %p57
      %s60 = sadd.s32 %s59, 1
      %p63 = scmp.eq.s32.totalorder %s13, 5
      %p64 = scmp.ne.s32.totalorder %s59, %s61
      %p65 = scmp.eq.s32.totalorder %s13, 0
      %p66 = por %p64, %p65
      %p67 = scmp.ne.s32.totalorder %s59, %s61
      %p68 = scmp.eq.s32.totalorder %s18, 5
      %p69 = por %p67, %p68
      %p70 = scmp.ne.s32.totalorder %s61, %s62
      %p71 = scmp.eq.s32.totalorder %s18, 0
      %p72 = por %p70, %p71
      %p73 = scmp.ne.s32.totalorder %s61, %s62
      %p74 = scmp.eq.s32.totalorder %s19, 5
      %p75 = por %p73, %p74
      %p77 = scmp.ne.s32.totalorder %s62, %s76
      %p78 = scmp.eq.s32.totalorder %s19, 0
      %p79 = por %p77, %p78
      %s80 = ssub.s32 %s21, 1
      %p81 = scmp.gt.s32.totalorder %s80, 0
      %s82 = scalar_select %p81, %s80, 0
      %s83 = ssub.s32 %s28, 1
      %p84 = scmp.gt.s32.totalorder %s83, 0
      %s85 = scalar_select %p84, %s83, 0
      %s86 = ssub.s32 %s82, %s85
      %p87 = scmp.eq.s32.totalorder %s86, 0
      %s89 = sadd.s32 %s88, 1
      %s90 = scalar_select %p87, %s88, %s89
      %p93 = pneg %p87
      %p94 = scmp.eq.s32.totalorder %s13, 5
      %p95 = por %p93, %p94
      %p96 = scmp.ne.s32.totalorder %s88, %s91
      %p97 = scmp.eq.s32.totalorder %s13, 0
      %p98 = por %p96, %p97
      %p99 = scmp.ne.s32.totalorder %s88, %s91
      %p100 = scmp.eq.s32.totalorder %s18, 5
      %p101 = por %p99, %p100
      %p102 = scmp.ne.s32.totalorder %s91, %s92
      %p103 = scmp.eq.s32.totalorder %s18, 0
      %p104 = por %p102, %p103
      %p105 = scmp.ne.s32.totalorder %s91, %s92
      %p106 = scmp.eq.s32.totalorder %s19, 5
      %p107 = por %p105, %p106
      %p109 = scmp.ne.s32.totalorder %s92, %s108
      %p110 = scmp.eq.s32.totalorder %s19, 0
      %p111 = por %p109, %p110
      %s112 = ssub.s32 %s21, %s28
      %s113 = ssub.s32 %s20, %s32
      %s114 = sor.u32 %s112, %s113
      %p115 = scmp.eq.s32.totalorder %s114, 0
      %s117 = sadd.s32 %s116, 1
      %s118 = scalar_select %p115, %s116, %s117
      %p121 = pneg %p115
      %p122 = scmp.eq.s32.totalorder %s13, 5
      %p123 = por %p121, %p122
      %p124 = scmp.ne.s32.totalorder %s116, %s119
      %p125 = scmp.eq.s32.totalorder %s13, 0
      %p126 = por %p124, %p125
      %p127 = scmp.ne.s32.totalorder %s116, %s119
      %p128 = scmp.eq.s32.totalorder %s18, 5
      %p129 = por %p127, %p128
      %p130 = scmp.ne.s32.totalorder %s119, %s120
      %p131 = scmp.eq.s32.totalorder %s18, 0
      %p132 = por %p130, %p131
      %p133 = scmp.ne.s32.totalorder %s119, %s120
      %p134 = scmp.eq.s32.totalorder %s19, 5
      %p135 = por %p133, %p134
      %p137 = scmp.ne.s32.totalorder %s120, %s136
      %p138 = scmp.eq.s32.totalorder %s19, 0
      %p139 = por %p137, %p138
      %p140 = scmp.le.s32.totalorder 1, %s13
      %p141 = scmp.lt.s32.totalorder %s13, 7
      %p142 = pnand %p140, %p141
      %p143 = pneg %p142
      // Predicated region
      $region9: #{mert_apply.1} parent=5 // pred_check
        _
      $region10: #{mert_apply.1} parent=5 // pred_check_branch
        %145 = sbr.rel (%p142) target = $region12
      $region11: #{mert_apply.1} parent=5 // pred_region
        %s146 = ssub.s32 %s13, 1
        // Predicated region
        $region13: #{mert_apply.1} parent=11 // pred_check
          %p147 = pneg %p72
        $region14: #{mert_apply.1} parent=11 // pred_check_branch
          %149 = sbr.rel (%p147) target = $region16
        $region15: #{mert_apply.1} parent=11 // pred_region
          %151 = vsyncadd [#allocation4], 0
          %s152 = sshll.u32 %s1, 4
          %s153 = int_to_ptr.hbm [resolvable:$true] %s152
          %s154 = sshll.u32 [#allocation3], 4
          %s155 = int_to_ptr.vmem [resolvable:$true] %s154
          %160 = dma.hbm_to_vmem [thread:$0]  %s153, 9088, %s155, [#allocation4], 128, 128, 8
        $region16: #{mert_apply.1} parent=11 // pred_fallthru
          _
      $region12: #{mert_apply.1} parent=5 // pred_fallthru
        _
      %p161 = scmp.lt.s32.totalorder %s13, 6
      // Predicated region
      $region17: #{mert_apply.1} parent=5 // pred_check
        %p162 = pneg %p161
      $region18: #{mert_apply.1} parent=5 // pred_check_branch
        %164 = sbr.rel (%p162) target = $region20
      $region19: #{mert_apply.1} parent=5 // pred_region
        // Predicated region
        $region21: #{mert_apply.1} parent=19 // pred_check
          %p165 = pneg %p45
        $region22: #{mert_apply.1} parent=19 // pred_check_branch
          %167 = sbr.rel (%p165) target = $region24
        $region23: #{mert_apply.1} parent=19 // pred_region
          %p168 = scmp.lt.s32.totalorder %s20, 1
          %s169 = scalar_select %p168, %s20, 1
          %s170 = smul.addr %s169, 5
          %s171 = smul.addr %s170, 8
          %s172 = scalar_lea.vmem %s0, %s171
        $region24: #{mert_apply.1} parent=19 // pred_fallthru
          _
        // Predicated region
        $region25: #{mert_apply.1} parent=19 // pred_check
          %p173 = pneg %p98
        $region26: #{mert_apply.1} parent=19 // pred_check_branch
          %175 = sbr.rel (%p173) target = $region28
        $region27: #{mert_apply.1} parent=19 // pred_region
          %s176 = sand.u32 %s88, 1
          %s177 = scalar_lea.sflag [#allocation6], %s176
          %s178 = sand.u32 %s88, 1
          %s179 = smul.addr %s178, 168
          %s180 = scalar_lea.vmem [#allocation5], %s179
          %s181 = ssub.s32 %s21, 1
          %p182 = scmp.gt.s32.totalorder %s181, 0
          %s183 = scalar_select %p182, %s181, 0
          %185 = vsyncadd %s177, 0
          %s186 = smul.addr %s183, 21
          %s187 = smul.addr %s186, 8
          %s188 = scalar_lea.hbm %s2, %s187
          %s189 = sshll.u32 %s188, 4
          %s190 = int_to_ptr.hbm [resolvable:$true] %s189
          %s191 = sshll.u32 %s180, 4
          %s192 = int_to_ptr.vmem [resolvable:$true] %s191
          %197 = dma.hbm_to_vmem [thread:$0]  %s190, 2688, %s192, %s177, 128, 128, 8
        $region28: #{mert_apply.1} parent=19 // pred_fallthru
          _
      $region20: #{mert_apply.1} parent=5 // pred_fallthru
        _
      %p198 = scmp.le.s32.totalorder 1, %s13
      %p199 = scmp.lt.s32.totalorder %s13, 7
      %p200 = pnand %p198, %p199
      %p201 = pneg %p200
      // Predicated region
      $region29: #{mert_apply.1} parent=5 // pred_check
        _
      $region30: #{mert_apply.1} parent=5 // pred_check_branch
        %203 = sbr.rel (%p200) target = $region32
      $region31: #{mert_apply.1} parent=5 // pred_region
        %s204 = ssub.s32 %s13, 1
        // Predicated region
        $region33: #{mert_apply.1} parent=31 // pred_check
          %p205 = pneg %p72
        $region34: #{mert_apply.1} parent=31 // pred_check_branch
          %207 = sbr.rel (%p205) target = $region36
        $region35: #{mert_apply.1} parent=31 // pred_region
          %209 = dma.done [#allocation4], 9088
        $region36: #{mert_apply.1} parent=31 // pred_fallthru
          _
        %s210 = sand.u32 %s91, 1
        %s211 = scalar_lea.sflag [#allocation6], %s210
        %s212 = sand.u32 %s91, 1
        %s213 = smul.addr %s212, 168
        %s214 = scalar_lea.vmem [#allocation5], %s213
        // Predicated region
        $region37: #{mert_apply.1} parent=31 // pred_check
          %p215 = pneg %p104
        $region38: #{mert_apply.1} parent=31 // pred_check_branch
          %217 = sbr.rel (%p215) target = $region40
        $region39: #{mert_apply.1} parent=31 // pred_region
          %219 = dma.done %s211, 2688
        $region40: #{mert_apply.1} parent=31 // pred_fallthru
          _
        %p220 = scmp.lt.s32.totalorder %s22, 1
        %s221 = scalar_select %p220, %s22, 1
        %s222 = smul.addr %s221, 5
        %s223 = smul.addr %s222, 8
        %s224 = scalar_lea.vmem %s0, %s223
        %p225 = pneg %p51
        %p226 = pneg %p48
        %p227 = pneg %p72
        %p228 = pneg %p69
        %s229 = sand.u32 %s91, 1
        %s230 = scalar_lea.sflag [#allocation6], %s229
        %s231 = sand.u32 %s91, 1
        %s232 = smul.addr %s231, 168
        %s233 = scalar_lea.vmem [#allocation5], %s232
        %p234 = pneg %p104
        %p235 = pneg %p101
        %p236 = pneg %p132
        %p237 = pneg %p129
        %p238 = scmp.lt.s32.totalorder %s23, 2
        %s239 = scalar_select %p238, %s23, 2
        %p240 = scmp.lt.s32.totalorder %s22, 1
        %s241 = scalar_select %p240, %s22, 1
        %s242 = smul.addr %s241, 2
        %s243 = smul.addr %s239, 4
        %s244 = sadd.s32 %s242, %s243
        %s245 = smul.addr %s244, 8
        %s246 = scalar_lea.vmem %s3, %s245
        %p247 = scmp.lt.s32.totalorder %s22, 1
        %s248 = scalar_select %p247, %s22, 1
        %s249 = smul.addr %s248, 5
        %s250 = smul.addr %s249, 8
        %s251 = scalar_lea.vmem %s0, %s250
        %s252 = ssub.s32 %s23, 1
        %p253 = scmp.gt.s32.totalorder %s252, 0
        %s254 = scalar_select %p253, %s252, 0
        %p255 = scmp.lt.s32.totalorder %s23, 2
        %s256 = scalar_select %p255, %s23, 2
        %p257 = scmp.lt.s32.totalorder %s22, 1
        %s258 = scalar_select %p257, %s22, 1
        %s259 = smul.addr %s258, 2
        %s260 = smul.addr %s256, 4
        %s261 = sadd.s32 %s259, %s260
        %s262 = smul.addr %s261, 8
        %s263 = scalar_lea.vmem %s3, %s262
        %p264 = scmp.eq.s32.totalorder %s23, 0
        // Predicated region
        $region41: #{mert_apply.1} parent=31 // pred_check
          %p265 = pneg %p264
        $region42: #{mert_apply.1} parent=31 // pred_check_branch
          %267 = sbr.rel (%p265) target = $region44
        $region43: #{mert_apply.1} parent=31 // pred_region
          %v268 = vld [vmem:[#allocation3 + $0x168] sm:$0xff]
          %v269 = vld [vmem:[#allocation3 + $0x170] sm:$0xff]
          %v270 = vld [vmem:[%s251] sm:$0xff]
          %v271 = vld [vmem:[%s251 + $0x8] sm:$0xff]
          %v272 = vld [vmem:[%s251 + $0x10] sm:$0xff]
          %v273 = vld [vmem:[%s251 + $0x18] sm:$0xff]
          %v274 = vld [vmem:[%s251 + $0x20] sm:$0xff]
          %vm275 = vcmask 64512
          %v276 = vsel %vm275, %v270, 0.0
          %277 = vadd.xlane.f32.xlu0 %v276
          %v278 = vpop.xlane.xlu0 %277
          %v279 = vsel %vm275, %v271, 0.0
          %280 = vadd.xlane.f32.xlu0 %v279
          %v281 = vpop.xlane.xlu0 %280
          %v282 = vsel %vm275, %v272, 0.0
          %283 = vadd.xlane.f32.xlu0 %v282
          %v284 = vpop.xlane.xlu0 %283
          %v285 = vsel %vm275, %v273, 0.0
          %286 = vadd.xlane.f32.xlu0 %v285
          %v287 = vpop.xlane.xlu0 %286
          %v288 = vsel %vm275, %v274, 0.0
          %289 = vadd.xlane.f32.xlu0 %v288
          %v290 = vpop.xlane.xlu0 %289
          %v291 = vadd.f32 %v278, %v281
          %v292 = vadd.f32 %v291, %v284
          %v293 = vadd.f32 %v292, %v287
          %v294 = vadd.f32 %v293, %v290
          %v295 = vrot.slane %v294, 4
          %v296 = vadd.f32 %v294, %v295
          %v297 = vrot.slane %v296, 2
          %v298 = vadd.f32 %v296, %v297
          %v299 = vrot.slane %v298, 1
          %v300 = vadd.f32 %v298, %v299
          %v301 = vmul.f32 %v270, %v270
          %v302 = vmul.f32 %v271, %v271
          %v303 = vmul.f32 %v272, %v272
          %v304 = vmul.f32 %v273, %v273
          %v305 = vmul.f32 %v274, %v274
          %v306 = vsel %vm275, %v301, 0.0
          %307 = vadd.xlane.f32.xlu0 %v306
          %v308 = vpop.xlane.xlu0 %307
          %v309 = vsel %vm275, %v302, 0.0
          %310 = vadd.xlane.f32.xlu0 %v309
          %v311 = vpop.xlane.xlu0 %310
          %v312 = vsel %vm275, %v303, 0.0
          %313 = vadd.xlane.f32.xlu0 %v312
          %v314 = vpop.xlane.xlu0 %313
          %v315 = vsel %vm275, %v304, 0.0
          %316 = vadd.xlane.f32.xlu0 %v315
          %v317 = vpop.xlane.xlu0 %316
          %v318 = vsel %vm275, %v305, 0.0
          %319 = vadd.xlane.f32.xlu0 %v318
          %v320 = vpop.xlane.xlu0 %319
          %v321 = vadd.f32 %v308, %v311
          %v322 = vadd.f32 %v321, %v314
          %v323 = vadd.f32 %v322, %v317
          %v324 = vadd.f32 %v323, %v320
          %v325 = vrot.slane %v324, 4
          %v326 = vadd.f32 %v324, %v325
          %v327 = vrot.slane %v326, 2
          %v328 = vadd.f32 %v326, %v327
          %v329 = vrot.slane %v328, 1
          %v330 = vadd.f32 %v328, %v329
          %v331 = vrcp.pop 170.0
          %v332 = vmul.f32 170.0, %v331
          %v333 = vsub.f32 1.0, %v332
          %v334 = vmul.f32 %v331, %v333
          %v335 = vadd.f32 %v331, %v334
          %vm336 = vweird.f32 %v331
          %v337 = vsel %vm336, %v331, %v335
          %v338 = vmul.f32 %v300, %v337
          %v339 = vmul.f32 %v330, %v337
          %v340 = vmul.f32 %v338, %v338
          %v341 = vsub.f32 %v339, %v340
          %v342 = vsub.f32 %v270, %v338
          %v343 = vsub.f32 %v271, %v338
          %v344 = vsub.f32 %v272, %v338
          %v345 = vsub.f32 %v273, %v338
          %v346 = vsub.f32 %v274, %v338
          %v347 = vadd.f32 %v341, 1e-07
          %v348 = vrsqrt.pop %v347
          %v349 = vmul.f32 %v348, %v347
          %v350 = vmul.f32 %v349, %v348
          %v351 = vmul.f32 0.5, %v350
          %v352 = vsub.f32 1.5, %v351
          %v353 = vmul.f32 %v348, %v352
          %vm354 = vweird.f32 %v347
          %vm355 = vweird.f32 %v348
          %vm356 = vmor %vm354, %vm355
          %v357 = vsel %vm356, %v348, %v353
          %v358 = vmul.f32 %v342, %v357
          %v359 = vmul.f32 %v343, %v357
          %v360 = vmul.f32 %v344, %v357
          %v361 = vmul.f32 %v345, %v357
          %v362 = vmul.f32 %v346, %v357
          %v363 = vld [vmem:[#allocation3] sm:$0xff]
          %v364 = vld [vmem:[#allocation3 + $0x8] sm:$0xff]
          %v365 = vld [vmem:[#allocation3 + $0x10] sm:$0xff]
          %v366 = vld [vmem:[#allocation3 + $0x18] sm:$0xff]
          %v367 = vld [vmem:[#allocation3 + $0x20] sm:$0xff]
          %vm368 = vcmask 326656
          %v370 = vsel %vm368, %v363, 0
          %v373 = vsel %vm368, %v364, 0
          %v376 = vsel %vm368, %v365, 0
          %v379 = vsel %vm368, %v366, 0
          %v382 = vsel %vm368, %v367, 0
          %384 = vmatpush.msra.mxu0 0.0
          %385 = vmatpush.msra.mxu0 0.0
          %386 = vmatpush.msra.mxu0 0.0
          %387 = vmatpush.msra.mxu0 0.0
          %388 = vmatpush.msra.mxu0 0.0
          %389 = vmatpush.msra.mxu0 0.0
          %390 = vmatpush.msra.mxu0 0.0
          %391 = vmatpush.msra.mxu0 0.0
          %392 = vmatpush.msra.mxu0 0.0
          %393 = vmatpush.msra.mxu0 0.0
          %394 = vmatpush.msra.mxu0 0.0
          %395 = vmatpush.msra.mxu0 %v362
          %396 = vmatpush.msra.mxu0 %v361
          %397 = vmatpush.msra.mxu0 %v360
          %398 = vmatpush.msra.mxu0 %v359
          %399 = vmatpush.msra.mxu0 %v358
          %400 = vmatmul.f32.gmra.mxu0 %v370
          %v401 = vpop.f32.mrf.mxu0
          %v402 = vadd.f32 0.0, %v401
          %403 = vmatmul.f32.gmra.mxu0 %v373
          %v404 = vpop.f32.mrf.mxu0
          %v405 = vadd.f32 0.0, %v404
          %406 = vmatmul.f32.gmra.mxu0 %v376
          %v407 = vpop.f32.mrf.mxu0
          %v408 = vadd.f32 0.0, %v407
          %409 = vmatmul.f32.gmra.mxu0 %v379
          %v410 = vpop.f32.mrf.mxu0
          %v411 = vadd.f32 0.0, %v410
          %412 = vmatmul.f32.gmra.mxu0 %v382
          %v413 = vpop.f32.mrf.mxu0
          %v414 = vadd.f32 0.0, %v413
          %415 = vdwg.mxu0
          %v416 = vld [vmem:[#allocation3 + $0x98] sm:$0xff]
          %v417 = vld [vmem:[#allocation3 + $0xa0] sm:$0xff]
          %v419 = vsel %vm275, %v402, 0
          %v422 = vsel %vm275, %v405, 0
          %v425 = vsel %vm275, %v408, 0
          %v428 = vsel %vm275, %v411, 0
          %v431 = vsel %vm275, %v414, 0
          %433 = vmatpush.msra.mxu0 0.0
          %434 = vmatpush.msra.mxu0 0.0
          %435 = vmatpush.msra.mxu0 0.0
          %436 = vmatpush.msra.mxu0 0.0
          %437 = vmatpush.msra.mxu0 0.0
          %438 = vmatpush.msra.mxu0 0.0
          %439 = vmatpush.msra.mxu0 0.0
          %440 = vmatpush.msra.mxu0 0.0
          %441 = vmatpush.msra.mxu0 0.0
          %442 = vmatpush.msra.mxu0 0.0
          %443 = vmatpush.msra.mxu0 0.0
          %444 = vmatpush.msra.mxu0 0.0
          %445 = vmatpush.msra.mxu0 0.0
          %446 = vmatpush.msra.mxu0 0.0
          %447 = vmatpush.msra.mxu0 0.0
          %448 = vmatpush.msra.mxu0 %v417
          %449 = vmatmul.f32.gmra.mxu0 %v419
          %v450 = vpop.f32.mrf.mxu0
          %v451 = vadd.f32 0.0, %v450
          %452 = vmatmul.f32.gmra.mxu0 %v422
          %v453 = vpop.f32.mrf.mxu0
          %v454 = vadd.f32 0.0, %v453
          %455 = vmatmul.f32.gmra.mxu0 %v425
          %v456 = vpop.f32.mrf.mxu0
          %v457 = vadd.f32 0.0, %v456
          %458 = vmatmul.f32.gmra.mxu0 %v428
          %v459 = vpop.f32.mrf.mxu0
          %v460 = vadd.f32 0.0, %v459
          %461 = vmatmul.f32.gmra.mxu0 %v431
          %v462 = vpop.f32.mrf.mxu0
          %v463 = vadd.f32 0.0, %v462
          %464 = vdwg.mxu0
          %v466 = vsel %vm275, %v358, 0
          %v469 = vsel %vm275, %v359, 0
          %v472 = vsel %vm275, %v360, 0
          %v475 = vsel %vm275, %v361, 0
          %v478 = vsel %vm275, %v362, 0
          %480 = vmatpush.msra.mxu0 0.0
          %481 = vmatpush.msra.mxu0 0.0
          %482 = vmatpush.msra.mxu0 0.0
          %483 = vmatpush.msra.mxu0 0.0
          %484 = vmatpush.msra.mxu0 0.0
          %485 = vmatpush.msra.mxu0 0.0
          %486 = vmatpush.msra.mxu0 0.0
          %487 = vmatpush.msra.mxu0 0.0
          %488 = vmatpush.msra.mxu0 0.0
          %489 = vmatpush.msra.mxu0 0.0
          %490 = vmatpush.msra.mxu0 0.0
          %491 = vmatpush.msra.mxu0 0.0
          %492 = vmatpush.msra.mxu0 0.0
          %493 = vmatpush.msra.mxu0 0.0
          %494 = vmatpush.msra.mxu0 0.0
          %495 = vmatpush.msra.mxu0 %v416
          %496 = vmatmul.f32.gmra.mxu0 %v466
          %v497 = vpop.f32.mrf.mxu0
          %v498 = vadd.f32 %v451, %v497
          %499 = vmatmul.f32.gmra.mxu0 %v469
          %v500 = vpop.f32.mrf.mxu0
          %v501 = vadd.f32 %v454, %v500
          %502 = vmatmul.f32.gmra.mxu0 %v472
          %v503 = vpop.f32.mrf.mxu0
          %v504 = vadd.f32 %v457, %v503
          %505 = vmatmul.f32.gmra.mxu0 %v475
          %v506 = vpop.f32.mrf.mxu0
          %v507 = vadd.f32 %v460, %v506
          %508 = vmatmul.f32.gmra.mxu0 %v478
          %v509 = vpop.f32.mrf.mxu0
          %v510 = vadd.f32 %v463, %v509
          %511 = vdwg.mxu0
          %v512 = vperm.slane %v268, 0
          %v513 = vadd.f32 %v498, %v512
          %v514 = vadd.f32 %v501, %v512
          %v515 = vadd.f32 %v504, %v512
          %v516 = vadd.f32 %v507, %v512
          %v517 = vadd.f32 %v510, %v512
          %v518 = vlaneseq
          %v519 = vshrl.u32 %v518, 7
          %v520 = vadd.s32 %v519, 8
          %v521 = vadd.s32 %v519, 16
          %v522 = vadd.s32 %v519, 24
          %v523 = vadd.s32 %v519, 32
          %vm524 = vcmp.lt.s32.totalorder %v519, 33
          %vm525 = vcmp.lt.s32.totalorder %v520, 33
          %vm526 = vcmp.lt.s32.totalorder %v521, 33
          %vm527 = vcmp.lt.s32.totalorder %v522, 33
          %vm528 = vcmp.lt.s32.totalorder %v523, 33
          %v529 = vsel %vm524, 1, 0
          %v530 = vsel %vm525, 1, 0
          %v531 = vsel %vm526, 1, 0
          %v532 = vsel %vm527, 1, 0
          %v533 = vsel %vm528, 1, 0
          %v534 = vcvt.s32.f32 %v529
          %v535 = vcvt.s32.f32 %v530
          %v536 = vcvt.s32.f32 %v531
          %v537 = vcvt.s32.f32 %v532
          %v538 = vcvt.s32.f32 %v533
          %v539 = vmul.f32 %v513, %v534
          %v540 = vmul.f32 %v514, %v535
          %v541 = vmul.f32 %v515, %v536
          %v542 = vmul.f32 %v516, %v537
          %v543 = vmul.f32 %v517, %v538
          %vm544 = vcmask 130048
          %v545 = vsel %vm544, %v539, 0.0
          %v546 = vsel %vm544, %v540, 0.0
          %v547 = vadd.f32 %v545, %v546
          %v548 = vsel %vm544, %v541, 0.0
          %v549 = vadd.f32 %v547, %v548
          %v550 = vsel %vm544, %v542, 0.0
          %v551 = vadd.f32 %v549, %v550
          %v552 = vsel %vm544, %v543, 0.0
          %v553 = vadd.f32 %v551, %v552
          %v554 = vrot.slane %v553, 4
          %v555 = vadd.f32 %v553, %v554
          %v556 = vrot.slane %v555, 2
          %v557 = vadd.f32 %v555, %v556
          %v558 = vrot.slane %v557, 1
          %v559 = vadd.f32 %v557, %v558
          %v560 = vrcp.pop 33.0
          %v561 = vmul.f32 33.0, %v560
          %v562 = vsub.f32 1.0, %v561
          %v563 = vmul.f32 %v560, %v562
          %v564 = vadd.f32 %v560, %v563
          %vm565 = vweird.f32 %v560
          %v566 = vsel %vm565, %v560, %v564
          %v567 = vmul.f32 %v559, %v566
          %v568 = vsub.f32 %v513, %v567
          %v569 = vsub.f32 %v514, %v567
          %v570 = vsub.f32 %v515, %v567
          %v571 = vsub.f32 %v516, %v567
          %v572 = vsub.f32 %v517, %v567
          %v573 = vmul.f32 %v568, %v534
          %v574 = vmul.f32 %v569, %v535
          %v575 = vmul.f32 %v570, %v536
          %v576 = vmul.f32 %v571, %v537
          %v577 = vmul.f32 %v572, %v538
          %v578 = vmul.f32 %v573, %v573
          %v579 = vmul.f32 %v574, %v574
          %v580 = vmul.f32 %v575, %v575
          %v581 = vmul.f32 %v576, %v576
          %v582 = vmul.f32 %v577, %v577
          %v583 = vsel %vm544, %v578, 0.0
          %v584 = vsel %vm544, %v579, 0.0
          %v585 = vadd.f32 %v583, %v584
          %v586 = vsel %vm544, %v580, 0.0
          %v587 = vadd.f32 %v585, %v586
          %v588 = vsel %vm544, %v581, 0.0
          %v589 = vadd.f32 %v587, %v588
          %v590 = vsel %vm544, %v582, 0.0
          %v591 = vadd.f32 %v589, %v590
          %v592 = vrot.slane %v591, 4
          %v593 = vadd.f32 %v591, %v592
          %v594 = vrot.slane %v593, 2
          %v595 = vadd.f32 %v593, %v594
          %v596 = vrot.slane %v595, 1
          %v597 = vadd.f32 %v595, %v596
          %v598 = vmul.f32 %v597, %v566
          %v599 = vadd.f32 %v598, 1e-05
          %v600 = vrsqrt.pop %v599
          %v601 = vmul.f32 %v600, %v599
          %v602 = vmul.f32 %v601, %v600
          %v603 = vmul.f32 0.5, %v602
          %v604 = vsub.f32 1.5, %v603
          %v605 = vmul.f32 %v600, %v604
          %vm606 = vweird.f32 %v599
          %vm607 = vweird.f32 %v600
          %vm608 = vmor %vm606, %vm607
          %v609 = vsel %vm608, %v600, %v605
          %v610 = vmul.f32 %v568, %v609
          %v611 = vmul.f32 %v569, %v609
          %v612 = vmul.f32 %v570, %v609
          %v613 = vmul.f32 %v571, %v609
          %v614 = vmul.f32 %v572, %v609
          %v615 = vperm.slane %v268, 1
          %v616 = vmul.f32 %v610, %v615
          %v617 = vmul.f32 %v611, %v615
          %v618 = vmul.f32 %v612, %v615
          %v619 = vmul.f32 %v613, %v615
          %v620 = vmul.f32 %v614, %v615
          %v621 = vperm.slane %v268, 2
          %v622 = vadd.f32 %v616, %v621
          %v623 = vadd.f32 %v617, %v621
          %v624 = vadd.f32 %v618, %v621
          %v625 = vadd.f32 %v619, %v621
          %v626 = vadd.f32 %v620, %v621
          %v627 = vmul.f32 %v622, 0.5
          %v628 = vmul.f32 %v623, 0.5
          %v629 = vmul.f32 %v624, 0.5
          %v630 = vmul.f32 %v625, 0.5
          %v631 = vmul.f32 %v626, 0.5
          %v632 = vmul.f32 %v622, 0.044715
          %v633 = vmul.f32 %v623, 0.044715
          %v634 = vmul.f32 %v624, 0.044715
          %v635 = vmul.f32 %v625, 0.044715
          %v636 = vmul.f32 %v626, 0.044715
          %v637 = vmul.f32 %v632, %v622
          %v638 = vmul.f32 %v633, %v623
          %v639 = vmul.f32 %v634, %v624
          %v640 = vmul.f32 %v635, %v625
          %v641 = vmul.f32 %v636, %v626
          %v642 = vmul.f32 %v637, %v622
          %v643 = vmul.f32 %v638, %v623
          %v644 = vmul.f32 %v639, %v624
          %v645 = vmul.f32 %v640, %v625
          %v646 = vmul.f32 %v641, %v626
          %v647 = vadd.f32 %v622, %v642
          %v648 = vadd.f32 %v623, %v643
          %v649 = vadd.f32 %v624, %v644
          %v650 = vadd.f32 %v625, %v645
          %v651 = vadd.f32 %v626, %v646
          %v652 = vmul.f32 %v647, 0.7978846
          %v653 = vmul.f32 %v648, 0.7978846
          %v654 = vmul.f32 %v649, 0.7978846
          %v655 = vmul.f32 %v650, 0.7978846
          %v656 = vmul.f32 %v651, 0.7978846
          %v657 = vtanh.pop %v652
          %v658 = vtanh.pop %v653
          %v659 = vtanh.pop %v654
          %v660 = vtanh.pop %v655
          %v661 = vtanh.pop %v656
          %v662 = vadd.f32 %v657, 1.0
          %v663 = vadd.f32 %v658, 1.0
          %v664 = vadd.f32 %v659, 1.0
          %v665 = vadd.f32 %v660, 1.0
          %v666 = vadd.f32 %v661, 1.0
          %v667 = vmul.f32 %v627, %v662
          %v668 = vmul.f32 %v628, %v663
          %v669 = vmul.f32 %v629, %v664
          %v670 = vmul.f32 %v630, %v665
          %v671 = vmul.f32 %v631, %v666
          %v672 = vld [vmem:[#allocation3 + $0x28] sm:$0xff]
          %v673 = vld [vmem:[#allocation3 + $0x30] sm:$0xff]
          %v674 = vld [vmem:[#allocation3 + $0x38] sm:$0xff]
          %v675 = vld [vmem:[#allocation3 + $0x40] sm:$0xff]
          %v676 = vld [vmem:[#allocation3 + $0x48] sm:$0xff]
          %v677 = vld [vmem:[#allocation3 + $0x50] sm:$0xff]
          %v679 = vsel %vm368, %v672, 0
          %v682 = vsel %vm368, %v673, 0
          %v685 = vsel %vm368, %v674, 0
          %v688 = vsel %vm368, %v675, 0
          %v691 = vsel %vm368, %v676, 0
          %v694 = vsel %vm368, %v677, 0
          %696 = vmatpush.msra.mxu0 0.0
          %697 = vmatpush.msra.mxu0 0.0
          %698 = vmatpush.msra.mxu0 0.0
          %699 = vmatpush.msra.mxu0 0.0
          %700 = vmatpush.msra.mxu0 0.0
          %701 = vmatpush.msra.mxu0 0.0
          %702 = vmatpush.msra.mxu0 0.0
          %703 = vmatpush.msra.mxu0 0.0
          %704 = vmatpush.msra.mxu0 0.0
          %705 = vmatpush.msra.mxu0 0.0
          %706 = vmatpush.msra.mxu0 0.0
          %707 = vmatpush.msra.mxu0 %v671
          %708 = vmatpush.msra.mxu0 %v670
          %709 = vmatpush.msra.mxu0 %v669
          %710 = vmatpush.msra.mxu0 %v668
          %711 = vmatpush.msra.mxu0 %v667
          %712 = vmatmul.f32.gmra.mxu0 %v679
          %v713 = vpop.f32.mrf.mxu0
          %v714 = vadd.f32 0.0, %v713
          %715 = vmatmul.f32.gmra.mxu0 %v682
          %v716 = vpop.f32.mrf.mxu0
          %v717 = vadd.f32 0.0, %v716
          %718 = vmatmul.f32.gmra.mxu0 %v685
          %v719 = vpop.f32.mrf.mxu0
          %v720 = vadd.f32 0.0, %v719
          %721 = vmatmul.f32.gmra.mxu0 %v688
          %v722 = vpop.f32.mrf.mxu0
          %v723 = vadd.f32 0.0, %v722
          %724 = vmatmul.f32.gmra.mxu0 %v691
          %v725 = vpop.f32.mrf.mxu0
          %v726 = vadd.f32 0.0, %v725
          %727 = vmatmul.f32.gmra.mxu0 %v694
          %v728 = vpop.f32.mrf.mxu0
          %v729 = vadd.f32 0.0, %v728
          %730 = vdwg.mxu0
          %v731 = vld [vmem:[#allocation3 + $0xa8] sm:$0xff]
          %v732 = vld [vmem:[#allocation3 + $0xb0] sm:$0xff]
          %v733 = vld [vmem:[#allocation3 + $0xb8] sm:$0xff]
          %v734 = vld [vmem:[#allocation3 + $0xc0] sm:$0xff]
          %v735 = vld [vmem:[#allocation3 + $0xc8] sm:$0xff]
          %v736 = vld [vmem:[#allocation3 + $0xd0] sm:$0xff]
          %v738 = vsel %vm544, %v714, 0
          %v741 = vsel %vm544, %v717, 0
          %743 = vmatpush.msra.mxu0 0.0
          %744 = vmatpush.msra.mxu0 0.0
          %745 = vmatpush.msra.mxu0 0.0
          %746 = vmatpush.msra.mxu0 0.0
          %747 = vmatpush.msra.mxu0 0.0
          %748 = vmatpush.msra.mxu0 0.0
          %749 = vmatpush.msra.mxu0 0.0
          %750 = vmatpush.msra.mxu0 0.0
          %751 = vmatpush.msra.mxu0 0.0
          %752 = vmatpush.msra.mxu0 0.0
          %753 = vmatpush.msra.mxu0 0.0
          %754 = vmatpush.msra.mxu0 0.0
          %755 = vmatpush.msra.mxu0 0.0
          %756 = vmatpush.msra.mxu0 0.0
          %757 = vmatpush.msra.mxu0 %v732
          %758 = vmatpush.msra.mxu0 %v731
          %759 = vmatmul.f32.gmra.mxu0 %v738
          %v760 = vpop.f32.mrf.mxu0
          %v761 = vadd.f32 0.0, %v760
          %762 = vmatmul.f32.gmra.mxu0 %v741
          %v763 = vpop.f32.mrf.mxu0
          %v764 = vadd.f32 0.0, %v763
          %765 = vdwg.mxu0
          %v766 = vperm.slane %v268, 3
          %v767 = vadd.f32 %v766, %v761
          %v768 = vadd.f32 %v766, %v764
          %v770 = vsel %vm544, %v720, 0
          %v773 = vsel %vm544, %v723, 0
          %775 = vmatpush.msra.mxu0 0.0
          %776 = vmatpush.msra.mxu0 0.0
          %777 = vmatpush.msra.mxu0 0.0
          %778 = vmatpush.msra.mxu0 0.0
          %779 = vmatpush.msra.mxu0 0.0
          %780 = vmatpush.msra.mxu0 0.0
          %781 = vmatpush.msra.mxu0 0.0
          %782 = vmatpush.msra.mxu0 0.0
          %783 = vmatpush.msra.mxu0 0.0
          %784 = vmatpush.msra.mxu0 0.0
          %785 = vmatpush.msra.mxu0 0.0
          %786 = vmatpush.msra.mxu0 0.0
          %787 = vmatpush.msra.mxu0 0.0
          %788 = vmatpush.msra.mxu0 0.0
          %789 = vmatpush.msra.mxu0 %v734
          %790 = vmatpush.msra.mxu0 %v733
          %791 = vmatmul.f32.gmra.mxu0 %v770
          %v792 = vpop.f32.mrf.mxu0
          %v793 = vadd.f32 0.0, %v792
          %794 = vmatmul.f32.gmra.mxu0 %v773
          %v795 = vpop.f32.mrf.mxu0
          %v796 = vadd.f32 0.0, %v795
          %797 = vdwg.mxu0
          %v798 = vadd.f32 %v767, %v793
          %v799 = vadd.f32 %v768, %v796
          %v801 = vsel %vm544, %v726, 0
          %v804 = vsel %vm544, %v729, 0
          %806 = vmatpush.msra.mxu0 0.0
          %807 = vmatpush.msra.mxu0 0.0
          %808 = vmatpush.msra.mxu0 0.0
          %809 = vmatpush.msra.mxu0 0.0
          %810 = vmatpush.msra.mxu0 0.0
          %811 = vmatpush.msra.mxu0 0.0
          %812 = vmatpush.msra.mxu0 0.0
          %813 = vmatpush.msra.mxu0 0.0
          %814 = vmatpush.msra.mxu0 0.0
          %815 = vmatpush.msra.mxu0 0.0
          %816 = vmatpush.msra.mxu0 0.0
          %817 = vmatpush.msra.mxu0 0.0
          %818 = vmatpush.msra.mxu0 0.0
          %819 = vmatpush.msra.mxu0 0.0
          %820 = vmatpush.msra.mxu0 %v736
          %821 = vmatpush.msra.mxu0 %v735
          %822 = vmatmul.f32.gmra.mxu0 %v801
          %v823 = vpop.f32.mrf.mxu0
          %v824 = vadd.f32 0.0, %v823
          %825 = vmatmul.f32.gmra.mxu0 %v804
          %v826 = vpop.f32.mrf.mxu0
          %v827 = vadd.f32 0.0, %v826
          %828 = vdwg.mxu0
          %v829 = vadd.f32 %v798, %v824
          %v830 = vadd.f32 %v799, %v827
          %v831 = vmul.f32 %v829, 0.5
          %v832 = vmul.f32 %v830, 0.5
          %v833 = vmul.f32 %v829, 0.044715
          %v834 = vmul.f32 %v830, 0.044715
          %v835 = vmul.f32 %v833, %v829
          %v836 = vmul.f32 %v834, %v830
          %v837 = vmul.f32 %v835, %v829
          %v838 = vmul.f32 %v836, %v830
          %v839 = vadd.f32 %v829, %v837
          %v840 = vadd.f32 %v830, %v838
          %v841 = vmul.f32 %v839, 0.7978846
          %v842 = vmul.f32 %v840, 0.7978846
          %v843 = vtanh.pop %v841
          %v844 = vtanh.pop %v842
          %v845 = vadd.f32 %v843, 1.0
          %v846 = vadd.f32 %v844, 1.0
          %v847 = vmul.f32 %v831, %v845
          %v848 = vmul.f32 %v832, %v846
          %v849 = vsel %vm544, %v847, 0.0
          %850 = vadd.xlane.f32.xlu0 %v849
          %v851 = vpop.xlane.xlu0 %850
          %v852 = vsel %vm544, %v848, 0.0
          %853 = vadd.xlane.f32.xlu0 %v852
          %v854 = vpop.xlane.xlu0 %853
          %v855 = vrcp.pop 16.0
          %v856 = vmul.f32 16.0, %v855
          %v857 = vsub.f32 1.0, %v856
          %v858 = vmul.f32 %v855, %v857
          %v859 = vadd.f32 %v855, %v858
          %vm860 = vweird.f32 %v855
          %v861 = vsel %vm860, %v855, %v859
          %v862 = vmul.f32 %v851, %v861
          %v863 = vmul.f32 %v854, %v861
          %v864 = vsub.f32 %v847, %v862
          %v865 = vsub.f32 %v848, %v863
          %v866 = vmul.f32 %v864, %v864
          %v867 = vmul.f32 %v865, %v865
          %v868 = vsel %vm544, %v866, 0.0
          %869 = vadd.xlane.f32.xlu0 %v868
          %v870 = vpop.xlane.xlu0 %869
          %v871 = vsel %vm544, %v867, 0.0
          %872 = vadd.xlane.f32.xlu0 %v871
          %v873 = vpop.xlane.xlu0 %872
          %v874 = vmul.f32 %v870, %v861
          %v875 = vmul.f32 %v873, %v861
          %v876 = vadd.f32 %v874, 1e-05
          %v877 = vadd.f32 %v875, 1e-05
          %v878 = vrsqrt.pop %v876
          %v879 = vmul.f32 %v878, %v876
          %v880 = vmul.f32 %v879, %v878
          %v881 = vmul.f32 0.5, %v880
          %v882 = vsub.f32 1.5, %v881
          %v883 = vmul.f32 %v878, %v882
          %vm884 = vweird.f32 %v876
          %vm885 = vweird.f32 %v878
          %vm886 = vmor %vm884, %vm885
          %v887 = vsel %vm886, %v878, %v883
          %v888 = vrsqrt.pop %v877
          %v889 = vmul.f32 %v888, %v877
          %v890 = vmul.f32 %v889, %v888
          %v891 = vmul.f32 0.5, %v890
          %v892 = vsub.f32 1.5, %v891
          %v893 = vmul.f32 %v888, %v892
          %vm894 = vweird.f32 %v877
          %vm895 = vweird.f32 %v888
          %vm896 = vmor %vm894, %vm895
          %v897 = vsel %vm896, %v888, %v893
          %v898 = vmul.f32 %v864, %v887
          %v899 = vmul.f32 %v865, %v897
          %v900 = vperm.slane %v268, 4
          %v901 = vmul.f32 %v898, %v900
          %v902 = vmul.f32 %v899, %v900
          %v903 = vperm.slane %v268, 5
          %v904 = vadd.f32 %v901, %v903
          %v905 = vadd.f32 %v902, %v903
          %v906 = vld [vmem:[#allocation3 + $0xd8] sm:$0xff]
          %v907 = vld [vmem:[#allocation3 + $0xe0] sm:$0xff]
          %v908 = vperm.slane %v268, 6
          %v910 = vsel %vm544, %v904, 0
          %v913 = vsel %vm544, %v905, 0
          %915 = vmatpush.msra.mxu0 0.0
          %916 = vmatpush.msra.mxu0 0.0
          %917 = vmatpush.msra.mxu0 0.0
          %918 = vmatpush.msra.mxu0 0.0
          %919 = vmatpush.msra.mxu0 0.0
          %920 = vmatpush.msra.mxu0 0.0
          %921 = vmatpush.msra.mxu0 0.0
          %922 = vmatpush.msra.mxu0 0.0
          %923 = vmatpush.msra.mxu0 0.0
          %924 = vmatpush.msra.mxu0 0.0
          %925 = vmatpush.msra.mxu0 0.0
          %926 = vmatpush.msra.mxu0 0.0
          %927 = vmatpush.msra.mxu0 0.0
          %928 = vmatpush.msra.mxu0 0.0
          %929 = vmatpush.msra.mxu0 %v907
          %930 = vmatpush.msra.mxu0 %v906
          %931 = vmatmul.f32.gmra.mxu0 %v910
          %v932 = vpop.f32.mrf.mxu0
          %v933 = vadd.f32 %v908, %v932
          %934 = vmatmul.f32.gmra.mxu0 %v913
          %v935 = vpop.f32.mrf.mxu0
          %v936 = vadd.f32 %v908, %v935
          %937 = vdwg.mxu0
          %v938 = vld [vmem:[#allocation3 + $0x58] sm:$0xff]
          %v939 = vld [vmem:[#allocation3 + $0x60] sm:$0xff]
          %v940 = vld [vmem:[#allocation3 + $0x68] sm:$0xff]
          %v941 = vld [vmem:[#allocation3 + $0x70] sm:$0xff]
          %v942 = vld [vmem:[#allocation3 + $0x78] sm:$0xff]
          %v943 = vld [vmem:[#allocation3 + $0x80] sm:$0xff]
          %v944 = vld [vmem:[#allocation3 + $0x88] sm:$0xff]
          %v945 = vld [vmem:[#allocation3 + $0x90] sm:$0xff]
          %v946 = vld [vmem:[#allocation3 + $0xe8] sm:$0xff]
          %v947 = vld [vmem:[#allocation3 + $0xf0] sm:$0xff]
          %v948 = vld [vmem:[#allocation3 + $0xf8] sm:$0xff]
          %v949 = vld [vmem:[#allocation3 + $0x100] sm:$0xff]
          %v950 = vld [vmem:[#allocation3 + $0x108] sm:$0xff]
          %v951 = vld [vmem:[#allocation3 + $0x110] sm:$0xff]
          %v952 = vld [vmem:[#allocation3 + $0x118] sm:$0xff]
          %v953 = vld [vmem:[#allocation3 + $0x120] sm:$0xff]
          %v954 = vld [vmem:[#allocation3 + $0x128] sm:$0xff]
          %v955 = vld [vmem:[#allocation3 + $0x130] sm:$0xff]
          %v956 = vld [vmem:[#allocation3 + $0x138] sm:$0xff]
          %v957 = vld [vmem:[#allocation3 + $0x140] sm:$0xff]
          %v958 = vld [vmem:[#allocation3 + $0x148] sm:$0xff]
          %v959 = vld [vmem:[#allocation3 + $0x150] sm:$0xff]
          %v960 = vld [vmem:[#allocation3 + $0x158] sm:$0xff]
          %v961 = vld [vmem:[#allocation3 + $0x160] sm:$0xff]
          %v963 = vsel %vm544, %v938, 0
          %v966 = vsel %vm544, %v939, 0
          %968 = vmatpush.msra.mxu0 0.0
          %969 = vmatpush.msra.mxu0 0.0
          %970 = vmatpush.msra.mxu0 0.0
          %971 = vmatpush.msra.mxu0 0.0
          %972 = vmatpush.msra.mxu0 0.0
          %973 = vmatpush.msra.mxu0 0.0
          %974 = vmatpush.msra.mxu0 0.0
          %975 = vmatpush.msra.mxu0 0.0
          %976 = vmatpush.msra.mxu0 0.0
          %977 = vmatpush.msra.mxu0 0.0
          %978 = vmatpush.msra.mxu0 0.0
          %979 = vmatpush.msra.mxu0 0.0
          %980 = vmatpush.msra.mxu0 0.0
          %981 = vmatpush.msra.mxu0 0.0
          %982 = vmatpush.msra.mxu0 %v936
          %983 = vmatpush.msra.mxu0 %v933
          %984 = vmatmul.f32.gmra.mxu0 %v963
          %v985 = vpop.f32.mrf.mxu0
          %v986 = vadd.f32 0.0, %v985
          %987 = vmatmul.f32.gmra.mxu0 %v966
          %v988 = vpop.f32.mrf.mxu0
          %v989 = vadd.f32 0.0, %v988
          %990 = vdwg.mxu0
          %vm991 = vcmask 261120
          %v993 = vsel %vm991, %v986, 0
          %v996 = vsel %vm991, %v989, 0
          %998 = vmatpush.msra.mxu0 0.0
          %999 = vmatpush.msra.mxu0 0.0
          %1000 = vmatpush.msra.mxu0 0.0
          %1001 = vmatpush.msra.mxu0 0.0
          %1002 = vmatpush.msra.mxu0 0.0
          %1003 = vmatpush.msra.mxu0 0.0
          %1004 = vmatpush.msra.mxu0 0.0
          %1005 = vmatpush.msra.mxu0 0.0
          %1006 = vmatpush.msra.mxu0 0.0
          %1007 = vmatpush.msra.mxu0 0.0
          %1008 = vmatpush.msra.mxu0 0.0
          %1009 = vmatpush.msra.mxu0 0.0
          %1010 = vmatpush.msra.mxu0 %v949
          %1011 = vmatpush.msra.mxu0 %v948
          %1012 = vmatpush.msra.mxu0 %v947
          %1013 = vmatpush.msra.mxu0 %v946
          %1014 = vmatmul.f32.gmra.mxu0 %v993
          %v1015 = vpop.f32.mrf.mxu0
          %v1016 = vadd.f32 0.0, %v1015
          %1017 = vmatmul.f32.gmra.mxu0 %v996
          %v1018 = vpop.f32.mrf.mxu0
          %v1019 = vadd.f32 0.0, %v1018
          %1020 = vdwg.mxu0
          %v1021 = vperm.slane %v268, 7
          %v1022 = vadd.f32 %v1021, %v1016
          %v1023 = vadd.f32 %v1021, %v1019
          %v1025 = vsel %vm544, %v940, 0
          %v1028 = vsel %vm544, %v941, 0
          %1030 = vmatpush.msra.mxu0 0.0
          %1031 = vmatpush.msra.mxu0 0.0
          %1032 = vmatpush.msra.mxu0 0.0
          %1033 = vmatpush.msra.mxu0 0.0
          %1034 = vmatpush.msra.mxu0 0.0
          %1035 = vmatpush.msra.mxu0 0.0
          %1036 = vmatpush.msra.mxu0 0.0
          %1037 = vmatpush.msra.mxu0 0.0
          %1038 = vmatpush.msra.mxu0 0.0
          %1039 = vmatpush.msra.mxu0 0.0
          %1040 = vmatpush.msra.mxu0 0.0
          %1041 = vmatpush.msra.mxu0 0.0
          %1042 = vmatpush.msra.mxu0 0.0
          %1043 = vmatpush.msra.mxu0 0.0
          %1044 = vmatpush.msra.mxu0 %v936
          %1045 = vmatpush.msra.mxu0 %v933
          %1046 = vmatmul.f32.gmra.mxu0 %v1025
          %v1047 = vpop.f32.mrf.mxu0
          %v1048 = vadd.f32 0.0, %v1047
          %1049 = vmatmul.f32.gmra.mxu0 %v1028
          %v1050 = vpop.f32.mrf.mxu0
          %v1051 = vadd.f32 0.0, %v1050
          %1052 = vdwg.mxu0
          %v1054 = vsel %vm991, %v1048, 0
          %v1057 = vsel %vm991, %v1051, 0
          %1059 = vmatpush.msra.mxu0 0.0
          %1060 = vmatpush.msra.mxu0 0.0
          %1061 = vmatpush.msra.mxu0 0.0
          %1062 = vmatpush.msra.mxu0 0.0
          %1063 = vmatpush.msra.mxu0 0.0
          %1064 = vmatpush.msra.mxu0 0.0
          %1065 = vmatpush.msra.mxu0 0.0
          %1066 = vmatpush.msra.mxu0 0.0
          %1067 = vmatpush.msra.mxu0 0.0
          %1068 = vmatpush.msra.mxu0 0.0
          %1069 = vmatpush.msra.mxu0 0.0
          %1070 = vmatpush.msra.mxu0 0.0
          %1071 = vmatpush.msra.mxu0 %v953
          %1072 = vmatpush.msra.mxu0 %v952
          %1073 = vmatpush.msra.mxu0 %v951
          %1074 = vmatpush.msra.mxu0 %v950
          %1075 = vmatmul.f32.gmra.mxu0 %v1054
          %v1076 = vpop.f32.mrf.mxu0
          %v1077 = vadd.f32 0.0, %v1076
          %1078 = vmatmul.f32.gmra.mxu0 %v1057
          %v1079 = vpop.f32.mrf.mxu0
          %v1080 = vadd.f32 0.0, %v1079
          %1081 = vdwg.mxu0
          %v1082 = vadd.f32 %v1022, %v1077
          %v1083 = vadd.f32 %v1023, %v1080
          %v1085 = vsel %vm544, %v942, 0
          %v1088 = vsel %vm544, %v943, 0
          %1090 = vmatpush.msra.mxu0 0.0
          %1091 = vmatpush.msra.mxu0 0.0
          %1092 = vmatpush.msra.mxu0 0.0
          %1093 = vmatpush.msra.mxu0 0.0
          %1094 = vmatpush.msra.mxu0 0.0
          %1095 = vmatpush.msra.mxu0 0.0
          %1096 = vmatpush.msra.mxu0 0.0
          %1097 = vmatpush.msra.mxu0 0.0
          %1098 = vmatpush.msra.mxu0 0.0
          %1099 = vmatpush.msra.mxu0 0.0
          %1100 = vmatpush.msra.mxu0 0.0
          %1101 = vmatpush.msra.mxu0 0.0
          %1102 = vmatpush.msra.mxu0 0.0
          %1103 = vmatpush.msra.mxu0 0.0
          %1104 = vmatpush.msra.mxu0 %v936
          %1105 = vmatpush.msra.mxu0 %v933
          %1106 = vmatmul.f32.gmra.mxu0 %v1085
          %v1107 = vpop.f32.mrf.mxu0
          %v1108 = vadd.f32 0.0, %v1107
          %1109 = vmatmul.f32.gmra.mxu0 %v1088
          %v1110 = vpop.f32.mrf.mxu0
          %v1111 = vadd.f32 0.0, %v1110
          %1112 = vdwg.mxu0
          %v1114 = vsel %vm991, %v1108, 0
          %v1117 = vsel %vm991, %v1111, 0
          %1119 = vmatpush.msra.mxu0 0.0
          %1120 = vmatpush.msra.mxu0 0.0
          %1121 = vmatpush.msra.mxu0 0.0
          %1122 = vmatpush.msra.mxu0 0.0
          %1123 = vmatpush.msra.mxu0 0.0
          %1124 = vmatpush.msra.mxu0 0.0
          %1125 = vmatpush.msra.mxu0 0.0
          %1126 = vmatpush.msra.mxu0 0.0
          %1127 = vmatpush.msra.mxu0 0.0
          %1128 = vmatpush.msra.mxu0 0.0
          %1129 = vmatpush.msra.mxu0 0.0
          %1130 = vmatpush.msra.mxu0 0.0
          %1131 = vmatpush.msra.mxu0 %v957
          %1132 = vmatpush.msra.mxu0 %v956
          %1133 = vmatpush.msra.mxu0 %v955
          %1134 = vmatpush.msra.mxu0 %v954
          %1135 = vmatmul.f32.gmra.mxu0 %v1114
          %v1136 = vpop.f32.mrf.mxu0
          %v1137 = vadd.f32 0.0, %v1136
          %1138 = vmatmul.f32.gmra.mxu0 %v1117
          %v1139 = vpop.f32.mrf.mxu0
          %v1140 = vadd.f32 0.0, %v1139
          %1141 = vdwg.mxu0
          %v1142 = vadd.f32 %v1082, %v1137
          %v1143 = vadd.f32 %v1083, %v1140
          %v1145 = vsel %vm544, %v944, 0
          %v1148 = vsel %vm544, %v945, 0
          %1150 = vmatpush.msra.mxu0 0.0
          %1151 = vmatpush.msra.mxu0 0.0
          %1152 = vmatpush.msra.mxu0 0.0
          %1153 = vmatpush.msra.mxu0 0.0
          %1154 = vmatpush.msra.mxu0 0.0
          %1155 = vmatpush.msra.mxu0 0.0
          %1156 = vmatpush.msra.mxu0 0.0
          %1157 = vmatpush.msra.mxu0 0.0
          %1158 = vmatpush.msra.mxu0 0.0
          %1159 = vmatpush.msra.mxu0 0.0
          %1160 = vmatpush.msra.mxu0 0.0
          %1161 = vmatpush.msra.mxu0 0.0
          %1162 = vmatpush.msra.mxu0 0.0
          %1163 = vmatpush.msra.mxu0 0.0
          %1164 = vmatpush.msra.mxu0 %v936
          %1165 = vmatpush.msra.mxu0 %v933
          %1166 = vmatmul.f32.gmra.mxu0 %v1145
          %v1167 = vpop.f32.mrf.mxu0
          %v1168 = vadd.f32 0.0, %v1167
          %1169 = vmatmul.f32.gmra.mxu0 %v1148
          %v1170 = vpop.f32.mrf.mxu0
          %v1171 = vadd.f32 0.0, %v1170
          %1172 = vdwg.mxu0
          %v1174 = vsel %vm991, %v1168, 0
          %v1177 = vsel %vm991, %v1171, 0
          %1179 = vmatpush.msra.mxu0 0.0
          %1180 = vmatpush.msra.mxu0 0.0
          %1181 = vmatpush.msra.mxu0 0.0
          %1182 = vmatpush.msra.mxu0 0.0
          %1183 = vmatpush.msra.mxu0 0.0
          %1184 = vmatpush.msra.mxu0 0.0
          %1185 = vmatpush.msra.mxu0 0.0
          %1186 = vmatpush.msra.mxu0 0.0
          %1187 = vmatpush.msra.mxu0 0.0
          %1188 = vmatpush.msra.mxu0 0.0
          %1189 = vmatpush.msra.mxu0 0.0
          %1190 = vmatpush.msra.mxu0 0.0
          %1191 = vmatpush.msra.mxu0 %v961
          %1192 = vmatpush.msra.mxu0 %v960
          %1193 = vmatpush.msra.mxu0 %v959
          %1194 = vmatpush.msra.mxu0 %v958
          %1195 = vmatmul.f32.gmra.mxu0 %v1174
          %v1196 = vpop.f32.mrf.mxu0
          %v1197 = vadd.f32 0.0, %v1196
          %1198 = vmatmul.f32.gmra.mxu0 %v1177
          %v1199 = vpop.f32.mrf.mxu0
          %v1200 = vadd.f32 0.0, %v1199
          %1201 = vdwg.mxu0
          %v1202 = vadd.f32 %v1142, %v1197
          %v1203 = vadd.f32 %v1143, %v1200
          %v1204 = vmul.f32 %v1202, 0.5
          %v1205 = vmul.f32 %v1203, 0.5
          %v1206 = vmul.f32 %v1202, 0.044715
          %v1207 = vmul.f32 %v1203, 0.044715
          %v1208 = vmul.f32 %v1206, %v1202
          %v1209 = vmul.f32 %v1207, %v1203
          %v1210 = vmul.f32 %v1208, %v1202
          %v1211 = vmul.f32 %v1209, %v1203
          %v1212 = vadd.f32 %v1202, %v1210
          %v1213 = vadd.f32 %v1203, %v1211
          %v1214 = vmul.f32 %v1212, 0.7978846
          %v1215 = vmul.f32 %v1213, 0.7978846
          %v1216 = vtanh.pop %v1214
          %v1217 = vtanh.pop %v1215
          %v1218 = vadd.f32 %v1216, 1.0
          %v1219 = vadd.f32 %v1217, 1.0
          %v1220 = vmul.f32 %v1204, %v1218
          %v1221 = vmul.f32 %v1205, %v1219
          %v1222 = vadd.f32 %v933, %v1220
          %v1223 = vadd.f32 %v936, %v1221
          %v1224 = vsel %vm991, %v1222, 0.0
          %1225 = vadd.xlane.f32.xlu0 %v1224
          %v1226 = vpop.xlane.xlu0 %1225
          %v1227 = vsel %vm991, %v1223, 0.0
          %1228 = vadd.xlane.f32.xlu0 %v1227
          %v1229 = vpop.xlane.xlu0 %1228
          %v1230 = vrcp.pop 32.0
          %v1231 = vmul.f32 32.0, %v1230
          %v1232 = vsub.f32 1.0, %v1231
          %v1233 = vmul.f32 %v1230, %v1232
          %v1234 = vadd.f32 %v1230, %v1233
          %vm1235 = vweird.f32 %v1230
          %v1236 = vsel %vm1235, %v1230, %v1234
          %v1237 = vmul.f32 %v1226, %v1236
          %v1238 = vmul.f32 %v1229, %v1236
          %v1239 = vsub.f32 %v1222, %v1237
          %v1240 = vsub.f32 %v1223, %v1238
          %v1241 = vmul.f32 %v1239, %v1239
          %v1242 = vmul.f32 %v1240, %v1240
          %v1243 = vsel %vm991, %v1241, 0.0
          %1244 = vadd.xlane.f32.xlu0 %v1243
          %v1245 = vpop.xlane.xlu0 %1244
          %v1246 = vsel %vm991, %v1242, 0.0
          %1247 = vadd.xlane.f32.xlu0 %v1246
          %v1248 = vpop.xlane.xlu0 %1247
          %v1249 = vmul.f32 %v1245, %v1236
          %v1250 = vmul.f32 %v1248, %v1236
          %v1251 = vadd.f32 %v1249, 1e-05
          %v1252 = vadd.f32 %v1250, 1e-05
          %v1253 = vrsqrt.pop %v1251
          %v1254 = vmul.f32 %v1253, %v1251
          %v1255 = vmul.f32 %v1254, %v1253
          %v1256 = vmul.f32 0.5, %v1255
          %v1257 = vsub.f32 1.5, %v1256
          %v1258 = vmul.f32 %v1253, %v1257
          %vm1259 = vweird.f32 %v1251
          %vm1260 = vweird.f32 %v1253
          %vm1261 = vmor %vm1259, %vm1260
          %v1262 = vsel %vm1261, %v1253, %v1258
          %v1263 = vrsqrt.pop %v1252
          %v1264 = vmul.f32 %v1263, %v1252
          %v1265 = vmul.f32 %v1264, %v1263
          %v1266 = vmul.f32 0.5, %v1265
          %v1267 = vsub.f32 1.5, %v1266
          %v1268 = vmul.f32 %v1263, %v1267
          %vm1269 = vweird.f32 %v1252
          %vm1270 = vweird.f32 %v1263
          %vm1271 = vmor %vm1269, %vm1270
          %v1272 = vsel %vm1271, %v1263, %v1268
          %v1273 = vmul.f32 %v1239, %v1262
          %v1274 = vmul.f32 %v1240, %v1272
          %v1275 = vperm.slane %v269, 0
          %v1276 = vmul.f32 %v1273, %v1275
          %v1277 = vmul.f32 %v1274, %v1275
          %v1278 = vperm.slane %v269, 1
          %v1279 = vadd.f32 %v1276, %v1278
          %v1280 = vadd.f32 %v1277, %v1278
          %1281 = vst.msk [vmem:[#allocation2] sm:$0xff] %vm991, %v1279
          %1282 = vst.msk [vmem:[#allocation2 + $0x8] sm:$0xff] %vm991, %v1280
        $region44: #{mert_apply.1} parent=31 // pred_fallthru
          _
        %p1283 = scmp.gt.s32.totalorder %s23, 0
        // Predicated region
        $region45: #{mert_apply.1} parent=31 // pred_check
          %p1284 = pneg %p1283
        $region46: #{mert_apply.1} parent=31 // pred_check_branch
          %1286 = sbr.rel (%p1284) target = $region48
        $region47: #{mert_apply.1} parent=31 // pred_region
          %v1287 = vld [vmem:[#allocation2] sm:$0xff]
          %v1288 = vld [vmem:[#allocation2 + $0x8] sm:$0xff]
          %v1289 = vld [vmem:[%s214 + $0xa0] sm:$0xff]
          %v1290 = vld [vmem:[#allocation3 + $0x178] sm:$0xff]
          %v1291 = vld [vmem:[#allocation3 + $0x180] sm:$0xff]
          %v1292 = vld [vmem:[#allocation3 + $0x188] sm:$0xff]
          %v1293 = vld [vmem:[#allocation3 + $0x190] sm:$0xff]
          %v1294 = vld [vmem:[#allocation3 + $0x198] sm:$0xff]
          %v1295 = vld [vmem:[#allocation3 + $0x1a0] sm:$0xff]
          %v1296 = vld [vmem:[#allocation3 + $0x1a8] sm:$0xff]
          %v1297 = vld [vmem:[#allocation3 + $0x1b0] sm:$0xff]
          %v1298 = vld [vmem:[#allocation3 + $0x1b8] sm:$0xff]
          %v1299 = vld [vmem:[#allocation3 + $0x1c0] sm:$0xff]
          %v1300 = vld [vmem:[#allocation3 + $0x1c8] sm:$0xff]
          %v1301 = vld [vmem:[#allocation3 + $0x1d0] sm:$0xff]
          %v1302 = vld [vmem:[#allocation3 + $0x1d8] sm:$0xff]
          %v1303 = vld [vmem:[#allocation3 + $0x1e0] sm:$0xff]
          %v1304 = vld [vmem:[#allocation3 + $0x1e8] sm:$0xff]
          %v1305 = vld [vmem:[#allocation3 + $0x1f0] sm:$0xff]
          %v1306 = vld [vmem:[#allocation3 + $0x1f8] sm:$0xff]
          %v1307 = vld [vmem:[#allocation3 + $0x200] sm:$0xff]
          %v1308 = vld [vmem:[#allocation3 + $0x208] sm:$0xff]
          %v1309 = vld [vmem:[#allocation3 + $0x210] sm:$0xff]
          %v1310 = vld [vmem:[#allocation3 + $0x218] sm:$0xff]
          %v1311 = vld [vmem:[#allocation3 + $0x220] sm:$0xff]
          %v1312 = vld [vmem:[#allocation3 + $0x228] sm:$0xff]
          %v1313 = vld [vmem:[#allocation3 + $0x230] sm:$0xff]
          %v1314 = vld [vmem:[%s214] sm:$0xff]
          %v1315 = vld [vmem:[%s214 + $0x8] sm:$0xff]
          %v1316 = vld [vmem:[%s214 + $0x10] sm:$0xff]
          %v1317 = vld [vmem:[%s214 + $0x18] sm:$0xff]
          %v1318 = vperm.slane %v1289, 0
          %vm1319 = vcmask 261120
          %v1321 = vsel %vm1319, %v1287, 0
          %v1324 = vsel %vm1319, %v1288, 0
          %1326 = vmatpush.msra.mxu0 0.0
          %1327 = vmatpush.msra.mxu0 0.0
          %1328 = vmatpush.msra.mxu0 0.0
          %1329 = vmatpush.msra.mxu0 0.0
          %1330 = vmatpush.msra.mxu0 0.0
          %1331 = vmatpush.msra.mxu0 0.0
          %1332 = vmatpush.msra.mxu0 0.0
          %1333 = vmatpush.msra.mxu0 0.0
          %1334 = vmatpush.msra.mxu0 0.0
          %1335 = vmatpush.msra.mxu0 0.0
          %1336 = vmatpush.msra.mxu0 0.0
          %1337 = vmatpush.msra.mxu0 0.0
          %1338 = vmatpush.msra.mxu0 %v1317
          %1339 = vmatpush.msra.mxu0 %v1316
          %1340 = vmatpush.msra.mxu0 %v1315
          %1341 = vmatpush.msra.mxu0 %v1314
          %1342 = vmatmul.f32.gmra.mxu0 %v1321
          %v1343 = vpop.f32.mrf.mxu0
          %v1344 = vadd.f32 %v1318, %v1343
          %1345 = vmatmul.f32.gmra.mxu0 %v1324
          %v1346 = vpop.f32.mrf.mxu0
          %v1347 = vadd.f32 %v1318, %v1346
          %1348 = vdwg.mxu0
          %1351 = vrot.lane.b32.xlu0 %v1344, 96
          %v1352 = vpop.permute.xlu0 %1351
          %1353 = vrot.lane.b32.xlu0 %v1347, 96
          %v1354 = vpop.permute.xlu0 %1353
          %vm1357 = vcmask 130048
          %v1359 = vsel %vm1357, %v1290, 0
          %v1362 = vsel %vm1357, %v1291, 0
          %v1365 = vsel %vm1357, %v1292, 0
          %v1368 = vsel %vm1357, %v1293, 0
          %v1371 = vsel %vm1357, %v1294, 0
          %v1374 = vsel %vm1357, %v1295, 0
          %v1377 = vsel %vm1357, %v1296, 0
          %v1380 = vsel %vm1357, %v1297, 0
          %1382 = vmatpush.msra.mxu0 0.0
          %1383 = vmatpush.msra.mxu0 0.0
          %1384 = vmatpush.msra.mxu0 0.0
          %1385 = vmatpush.msra.mxu0 0.0
          %1386 = vmatpush.msra.mxu0 0.0
          %1387 = vmatpush.msra.mxu0 0.0
          %1388 = vmatpush.msra.mxu0 0.0
          %1389 = vmatpush.msra.mxu0 0.0
          %1390 = vmatpush.msra.mxu0 0.0
          %1391 = vmatpush.msra.mxu0 0.0
          %1392 = vmatpush.msra.mxu0 0.0
          %1393 = vmatpush.msra.mxu0 0.0
          %1394 = vmatpush.msra.mxu0 0.0
          %1395 = vmatpush.msra.mxu0 0.0
          %1396 = vmatpush.msra.mxu0 %v1354
          %1397 = vmatpush.msra.mxu0 %v1352
          %1398 = vmatmul.f32.gmra.mxu0 %v1359
          %v1399 = vpop.f32.mrf.mxu0
          %v1400 = vadd.f32 0.0, %v1399
          %1401 = vmatmul.f32.gmra.mxu0 %v1362
          %v1402 = vpop.f32.mrf.mxu0
          %v1403 = vadd.f32 0.0, %v1402
          %1404 = vmatmul.f32.gmra.mxu0 %v1365
          %v1405 = vpop.f32.mrf.mxu0
          %v1406 = vadd.f32 0.0, %v1405
          %1407 = vmatmul.f32.gmra.mxu0 %v1368
          %v1408 = vpop.f32.mrf.mxu0
          %v1409 = vadd.f32 0.0, %v1408
          %1410 = vmatmul.f32.gmra.mxu0 %v1371
          %v1411 = vpop.f32.mrf.mxu0
          %v1412 = vadd.f32 0.0, %v1411
          %1413 = vmatmul.f32.gmra.mxu0 %v1374
          %v1414 = vpop.f32.mrf.mxu0
          %v1415 = vadd.f32 0.0, %v1414
          %1416 = vmatmul.f32.gmra.mxu0 %v1377
          %v1417 = vpop.f32.mrf.mxu0
          %v1418 = vadd.f32 0.0, %v1417
          %1419 = vmatmul.f32.gmra.mxu0 %v1380
          %v1420 = vpop.f32.mrf.mxu0
          %v1421 = vadd.f32 0.0, %v1420
          %1422 = vdwg.mxu0
          %v1423 = vmul.f32 %v1400, %v1298
          %v1424 = vmul.f32 %v1403, %v1299
          %v1425 = vmul.f32 %v1406, %v1300
          %v1426 = vmul.f32 %v1409, %v1301
          %v1427 = vmul.f32 %v1412, %v1302
          %v1428 = vmul.f32 %v1415, %v1303
          %v1429 = vmul.f32 %v1418, %v1304
          %v1430 = vmul.f32 %v1421, %v1305
          %1431 = vrot.lane.b32.xlu0 %v1344, 64
          %v1432 = vpop.permute.xlu0 %1431
          %1433 = vrot.lane.b32.xlu0 %v1347, 64
          %v1434 = vpop.permute.xlu0 %1433
          %1437 = vmatpush.msra.mxu0 0.0
          %1438 = vmatpush.msra.mxu0 0.0
          %1439 = vmatpush.msra.mxu0 0.0
          %1440 = vmatpush.msra.mxu0 0.0
          %1441 = vmatpush.msra.mxu0 0.0
          %1442 = vmatpush.msra.mxu0 0.0
          %1443 = vmatpush.msra.mxu0 0.0
          %1444 = vmatpush.msra.mxu0 0.0
          %1445 = vmatpush.msra.mxu0 0.0
          %1446 = vmatpush.msra.mxu0 0.0
          %1447 = vmatpush.msra.mxu0 0.0
          %1448 = vmatpush.msra.mxu0 0.0
          %1449 = vmatpush.msra.mxu0 0.0
          %1450 = vmatpush.msra.mxu0 0.0
          %1451 = vmatpush.msra.mxu0 %v1434
          %1452 = vmatpush.msra.mxu0 %v1432
          %1453 = vmatmul.f32.gmra.mxu0 %v1359
          %v1454 = vpop.f32.mrf.mxu0
          %v1455 = vadd.f32 0.0, %v1454
          %1456 = vmatmul.f32.gmra.mxu0 %v1362
          %v1457 = vpop.f32.mrf.mxu0
          %v1458 = vadd.f32 0.0, %v1457
          %1459 = vmatmul.f32.gmra.mxu0 %v1365
          %v1460 = vpop.f32.mrf.mxu0
          %v1461 = vadd.f32 0.0, %v1460
          %1462 = vmatmul.f32.gmra.mxu0 %v1368
          %v1463 = vpop.f32.mrf.mxu0
          %v1464 = vadd.f32 0.0, %v1463
          %1465 = vmatmul.f32.gmra.mxu0 %v1371
          %v1466 = vpop.f32.mrf.mxu0
          %v1467 = vadd.f32 0.0, %v1466
          %1468 = vmatmul.f32.gmra.mxu0 %v1374
          %v1469 = vpop.f32.mrf.mxu0
          %v1470 = vadd.f32 0.0, %v1469
          %1471 = vmatmul.f32.gmra.mxu0 %v1377
          %v1472 = vpop.f32.mrf.mxu0
          %v1473 = vadd.f32 0.0, %v1472
          %1474 = vmatmul.f32.gmra.mxu0 %v1380
          %v1475 = vpop.f32.mrf.mxu0
          %v1476 = vadd.f32 0.0, %v1475
          %1477 = vdwg.mxu0
          %v1478 = vmul.f32 %v1455, %v1298
          %v1479 = vmul.f32 %v1458, %v1299
          %v1480 = vmul.f32 %v1461, %v1300
          %v1481 = vmul.f32 %v1464, %v1301
          %v1482 = vmul.f32 %v1467, %v1302
          %v1483 = vmul.f32 %v1470, %v1303
          %v1484 = vmul.f32 %v1473, %v1304
          %v1485 = vmul.f32 %v1476, %v1305
          %v1486 = vsel %vm1319, %v1344, 0
          %v1488 = vsel %vm1319, %v1347, 0
          %v1491 = vsel %vm1319, %v1423, 0
          %v1494 = vsel %vm1319, %v1424, 0
          %v1497 = vsel %vm1319, %v1425, 0
          %v1500 = vsel %vm1319, %v1426, 0
          %v1503 = vsel %vm1319, %v1427, 0
          %v1506 = vsel %vm1319, %v1428, 0
          %v1509 = vsel %vm1319, %v1429, 0
          %v1512 = vsel %vm1319, %v1430, 0
          %1514 = vmatpush.xpose.msra.mxu0 0.0
          %1515 = vmatpush.xpose.msra.mxu0 0.0
          %1516 = vmatpush.xpose.msra.mxu0 0.0
          %1517 = vmatpush.xpose.msra.mxu0 0.0
          %1518 = vmatpush.xpose.msra.mxu0 0.0
          %1519 = vmatpush.xpose.msra.mxu0 0.0
          %1520 = vmatpush.xpose.msra.mxu0 0.0
          %1521 = vmatpush.xpose.msra.mxu0 0.0
          %1522 = vmatpush.xpose.msra.mxu0 %v1512
          %1523 = vmatpush.xpose.msra.mxu0 %v1509
          %1524 = vmatpush.xpose.msra.mxu0 %v1506
          %1525 = vmatpush.xpose.msra.mxu0 %v1503
          %1526 = vmatpush.xpose.msra.mxu0 %v1500
          %1527 = vmatpush.xpose.msra.mxu0 %v1497
          %1528 = vmatpush.xpose.msra.mxu0 %v1494
          %1529 = vmatpush.xpose.msra.mxu0 %v1491
          %1530 = vmatmul.f32.gmra.mxu0 %v1486
          %v1531 = vpop.f32.mrf.mxu0
          %v1532 = vadd.f32 0.0, %v1531
          %1533 = vmatmul.f32.gmra.mxu0 %v1488
          %v1534 = vpop.f32.mrf.mxu0
          %v1535 = vadd.f32 0.0, %v1534
          %1536 = vdwg.mxu0
          %v1537 = vmul.f32 %v1532, 0.35355338
          %v1538 = vmul.f32 %v1535, 0.35355338
          %vm1539 = vcmask 523264
          %v1540 = vsel %vm1539, %v1537, -inf
          %1541 = vmax.xlane.f32.xlu0 %v1540
          %v1542 = vpop.xlane.xlu0 %1541
          %v1543 = vsel %vm1539, %v1538, -inf
          %1544 = vmax.xlane.f32.xlu0 %v1543
          %v1545 = vpop.xlane.xlu0 %1544
          %v1546 = vsub.f32 %v1537, %v1542
          %v1547 = vsub.f32 %v1538, %v1545
          %v1548 = vmul.f32 %v1546, 1.442695
          %v1549 = vpow.pop %v1548
          %v1550 = vmul.f32 %v1547, 1.442695
          %v1551 = vpow.pop %v1550
          %v1553 = vsel %vm1539, %v1549, 0
          %v1556 = vsel %vm1539, %v1551, 0
          %1558 = vmatpush.msra.mxu0 0.0
          %1559 = vmatpush.msra.mxu0 0.0
          %1560 = vmatpush.msra.mxu0 0.0
          %1561 = vmatpush.msra.mxu0 0.0
          %1562 = vmatpush.msra.mxu0 0.0
          %1563 = vmatpush.msra.mxu0 0.0
          %1564 = vmatpush.msra.mxu0 0.0
          %1565 = vmatpush.msra.mxu0 0.0
          %1566 = vmatpush.msra.mxu0 %v1313
          %1567 = vmatpush.msra.mxu0 %v1312
          %1568 = vmatpush.msra.mxu0 %v1311
          %1569 = vmatpush.msra.mxu0 %v1310
          %1570 = vmatpush.msra.mxu0 %v1309
          %1571 = vmatpush.msra.mxu0 %v1308
          %1572 = vmatpush.msra.mxu0 %v1307
          %1573 = vmatpush.msra.mxu0 %v1306
          %1574 = vmatmul.f32.gmra.mxu0 %v1553
          %v1575 = vpop.f32.mrf.mxu0
          %v1576 = vadd.f32 0.0, %v1575
          %1577 = vmatmul.f32.gmra.mxu0 %v1556
          %v1578 = vpop.f32.mrf.mxu0
          %v1579 = vadd.f32 0.0, %v1578
          %1580 = vdwg.mxu0
          %v1581 = vrcp.pop %v1576
          %v1582 = vrcp.pop %v1579
          %v1583 = vmul.f32 %v1549, %v1581
          %v1584 = vmul.f32 %v1551, %v1582
          %v1586 = vsel %vm1539, %v1583, 0
          %v1589 = vsel %vm1539, %v1584, 0
          %1591 = vmatpush.msra.mxu0 0.0
          %1592 = vmatpush.msra.mxu0 0.0
          %1593 = vmatpush.msra.mxu0 0.0
          %1594 = vmatpush.msra.mxu0 0.0
          %1595 = vmatpush.msra.mxu0 0.0
          %1596 = vmatpush.msra.mxu0 0.0
          %1597 = vmatpush.msra.mxu0 0.0
          %1598 = vmatpush.msra.mxu0 0.0
          %1599 = vmatpush.msra.mxu0 %v1485
          %1600 = vmatpush.msra.mxu0 %v1484
          %1601 = vmatpush.msra.mxu0 %v1483
          %1602 = vmatpush.msra.mxu0 %v1482
          %1603 = vmatpush.msra.mxu0 %v1481
          %1604 = vmatpush.msra.mxu0 %v1480
          %1605 = vmatpush.msra.mxu0 %v1479
          %1606 = vmatpush.msra.mxu0 %v1478
          %1607 = vmatmul.f32.gmra.mxu0 %v1586
          %v1608 = vpop.f32.mrf.mxu0
          %v1609 = vadd.f32 0.0, %v1608
          %1610 = vmatmul.f32.gmra.mxu0 %v1589
          %v1611 = vpop.f32.mrf.mxu0
          %v1612 = vadd.f32 0.0, %v1611
          %1613 = vdwg.mxu0
          %v1614 = vld [vmem:[%s214 + $0x20] sm:$0xff]
          %v1615 = vld [vmem:[%s214 + $0x28] sm:$0xff]
          %v1616 = vld [vmem:[%s214 + $0x30] sm:$0xff]
          %v1617 = vld [vmem:[%s214 + $0x38] sm:$0xff]
          %v1618 = vperm.slane %v1289, 1
          %v1620 = vsel %vm1319, %v1609, 0
          %v1623 = vsel %vm1319, %v1612, 0
          %1625 = vmatpush.msra.mxu0 0.0
          %1626 = vmatpush.msra.mxu0 0.0
          %1627 = vmatpush.msra.mxu0 0.0
          %1628 = vmatpush.msra.mxu0 0.0
          %1629 = vmatpush.msra.mxu0 0.0
          %1630 = vmatpush.msra.mxu0 0.0
          %1631 = vmatpush.msra.mxu0 0.0
          %1632 = vmatpush.msra.mxu0 0.0
          %1633 = vmatpush.msra.mxu0 0.0
          %1634 = vmatpush.msra.mxu0 0.0
          %1635 = vmatpush.msra.mxu0 0.0
          %1636 = vmatpush.msra.mxu0 0.0
          %1637 = vmatpush.msra.mxu0 %v1617
          %1638 = vmatpush.msra.mxu0 %v1616
          %1639 = vmatpush.msra.mxu0 %v1615
          %1640 = vmatpush.msra.mxu0 %v1614
          %1641 = vmatmul.f32.gmra.mxu0 %v1620
          %v1642 = vpop.f32.mrf.mxu0
          %v1643 = vadd.f32 %v1618, %v1642
          %1644 = vmatmul.f32.gmra.mxu0 %v1623
          %v1645 = vpop.f32.mrf.mxu0
          %v1646 = vadd.f32 %v1618, %v1645
          %1647 = vdwg.mxu0
          %v1648 = vadd.f32 %v1643, %v1287
          %v1649 = vadd.f32 %v1646, %v1288
          %v1650 = vsel %vm1319, %v1648, 0.0
          %1651 = vadd.xlane.f32.xlu0 %v1650
          %v1652 = vpop.xlane.xlu0 %1651
          %v1653 = vsel %vm1319, %v1649, 0.0
          %1654 = vadd.xlane.f32.xlu0 %v1653
          %v1655 = vpop.xlane.xlu0 %1654
          %v1656 = vrcp.pop 32.0
          %v1657 = vmul.f32 32.0, %v1656
          %v1658 = vsub.f32 1.0, %v1657
          %v1659 = vmul.f32 %v1656, %v1658
          %v1660 = vadd.f32 %v1656, %v1659
          %vm1661 = vweird.f32 %v1656
          %v1662 = vsel %vm1661, %v1656, %v1660
          %v1663 = vmul.f32 %v1652, %v1662
          %v1664 = vmul.f32 %v1655, %v1662
          %v1665 = vsub.f32 %v1648, %v1663
          %v1666 = vsub.f32 %v1649, %v1664
          %v1667 = vmul.f32 %v1665, %v1665
          %v1668 = vmul.f32 %v1666, %v1666
          %v1669 = vsel %vm1319, %v1667, 0.0
          %1670 = vadd.xlane.f32.xlu0 %v1669
          %v1671 = vpop.xlane.xlu0 %1670
          %v1672 = vsel %vm1319, %v1668, 0.0
          %1673 = vadd.xlane.f32.xlu0 %v1672
          %v1674 = vpop.xlane.xlu0 %1673
          %v1675 = vmul.f32 %v1671, %v1662
          %v1676 = vmul.f32 %v1674, %v1662
          %v1677 = vadd.f32 %v1675, 1e-05
          %v1678 = vadd.f32 %v1676, 1e-05
          %v1679 = vrsqrt.pop %v1677
          %v1680 = vmul.f32 %v1679, %v1677
          %v1681 = vmul.f32 %v1680, %v1679
          %v1682 = vmul.f32 0.5, %v1681
          %v1683 = vsub.f32 1.5, %v1682
          %v1684 = vmul.f32 %v1679, %v1683
          %vm1685 = vweird.f32 %v1677
          %vm1686 = vweird.f32 %v1679
          %vm1687 = vmor %vm1685, %vm1686
          %v1688 = vsel %vm1687, %v1679, %v1684
          %v1689 = vrsqrt.pop %v1678
          %v1690 = vmul.f32 %v1689, %v1678
          %v1691 = vmul.f32 %v1690, %v1689
          %v1692 = vmul.f32 0.5, %v1691
          %v1693 = vsub.f32 1.5, %v1692
          %v1694 = vmul.f32 %v1689, %v1693
          %vm1695 = vweird.f32 %v1678
          %vm1696 = vweird.f32 %v1689
          %vm1697 = vmor %vm1695, %vm1696
          %v1698 = vsel %vm1697, %v1689, %v1694
          %v1699 = vmul.f32 %v1665, %v1688
          %v1700 = vmul.f32 %v1666, %v1698
          %v1701 = vperm.slane %v1289, 2
          %v1702 = vmul.f32 %v1699, %v1701
          %v1703 = vmul.f32 %v1700, %v1701
          %v1704 = vperm.slane %v1289, 3
          %v1705 = vadd.f32 %v1702, %v1704
          %v1706 = vadd.f32 %v1703, %v1704
          %v1707 = vld [vmem:[%s214 + $0x40] sm:$0xff]
          %v1708 = vld [vmem:[%s214 + $0x48] sm:$0xff]
          %v1709 = vld [vmem:[%s214 + $0x50] sm:$0xff]
          %v1710 = vld [vmem:[%s214 + $0x58] sm:$0xff]
          %v1711 = vperm.slane %v1289, 4
          %v1713 = vsel %vm1319, %v1705, 0
          %v1716 = vsel %vm1319, %v1706, 0
          %1718 = vmatpush.msra.mxu0 0.0
          %1719 = vmatpush.msra.mxu0 0.0
          %1720 = vmatpush.msra.mxu0 0.0
          %1721 = vmatpush.msra.mxu0 0.0
          %1722 = vmatpush.msra.mxu0 0.0
          %1723 = vmatpush.msra.mxu0 0.0
          %1724 = vmatpush.msra.mxu0 0.0
          %1725 = vmatpush.msra.mxu0 0.0
          %1726 = vmatpush.msra.mxu0 0.0
          %1727 = vmatpush.msra.mxu0 0.0
          %1728 = vmatpush.msra.mxu0 0.0
          %1729 = vmatpush.msra.mxu0 0.0
          %1730 = vmatpush.msra.mxu0 %v1710
          %1731 = vmatpush.msra.mxu0 %v1709
          %1732 = vmatpush.msra.mxu0 %v1708
          %1733 = vmatpush.msra.mxu0 %v1707
          %1734 = vmatmul.f32.gmra.mxu0 %v1713
          %v1735 = vpop.f32.mrf.mxu0
          %v1736 = vadd.f32 %v1711, %v1735
          %1737 = vmatmul.f32.gmra.mxu0 %v1716
          %v1738 = vpop.f32.mrf.mxu0
          %v1739 = vadd.f32 %v1711, %v1738
          %1740 = vdwg.mxu0
          %v1741 = vmul.f32 %v1736, 0.5
          %v1742 = vmul.f32 %v1739, 0.5
          %v1743 = vmul.f32 %v1736, 0.044715
          %v1744 = vmul.f32 %v1739, 0.044715
          %v1745 = vmul.f32 %v1743, %v1736
          %v1746 = vmul.f32 %v1744, %v1739
          %v1747 = vmul.f32 %v1745, %v1736
          %v1748 = vmul.f32 %v1746, %v1739
          %v1749 = vadd.f32 %v1736, %v1747
          %v1750 = vadd.f32 %v1739, %v1748
          %v1751 = vmul.f32 %v1749, 0.7978846
          %v1752 = vmul.f32 %v1750, 0.7978846
          %v1753 = vtanh.pop %v1751
          %v1754 = vtanh.pop %v1752
          %v1755 = vadd.f32 %v1753, 1.0
          %v1756 = vadd.f32 %v1754, 1.0
          %v1757 = vmul.f32 %v1741, %v1755
          %v1758 = vmul.f32 %v1742, %v1756
          %v1759 = vld [vmem:[%s214 + $0x60] sm:$0xff]
          %v1760 = vld [vmem:[%s214 + $0x68] sm:$0xff]
          %v1761 = vld [vmem:[%s214 + $0x70] sm:$0xff]
          %v1762 = vld [vmem:[%s214 + $0x78] sm:$0xff]
          %v1763 = vld [vmem:[%s214 + $0x80] sm:$0xff]
          %v1764 = vld [vmem:[%s214 + $0x88] sm:$0xff]
          %v1765 = vld [vmem:[%s214 + $0x90] sm:$0xff]
          %v1766 = vld [vmem:[%s214 + $0x98] sm:$0xff]
          %v1767 = vperm.slane %v1289, 5
          %v1769 = vsel %vm1539, %v1757, 0
          %v1772 = vsel %vm1539, %v1758, 0
          %1774 = vmatpush.msra.mxu0 0.0
          %1775 = vmatpush.msra.mxu0 0.0
          %1776 = vmatpush.msra.mxu0 0.0
          %1777 = vmatpush.msra.mxu0 0.0
          %1778 = vmatpush.msra.mxu0 0.0
          %1779 = vmatpush.msra.mxu0 0.0
          %1780 = vmatpush.msra.mxu0 0.0
          %1781 = vmatpush.msra.mxu0 0.0
          %1782 = vmatpush.msra.mxu0 %v1766
          %1783 = vmatpush.msra.mxu0 %v1765
          %1784 = vmatpush.msra.mxu0 %v1764
          %1785 = vmatpush.msra.mxu0 %v1763
          %1786 = vmatpush.msra.mxu0 %v1762
          %1787 = vmatpush.msra.mxu0 %v1761
          %1788 = vmatpush.msra.mxu0 %v1760
          %1789 = vmatpush.msra.mxu0 %v1759
          %1790 = vmatmul.f32.gmra.mxu0 %v1769
          %v1791 = vpop.f32.mrf.mxu0
          %v1792 = vadd.f32 %v1767, %v1791
          %1793 = vmatmul.f32.gmra.mxu0 %v1772
          %v1794 = vpop.f32.mrf.mxu0
          %v1795 = vadd.f32 %v1767, %v1794
          %1796 = vdwg.mxu0
          %v1797 = vadd.f32 %v1792, %v1705
          %v1798 = vadd.f32 %v1795, %v1706
          %v1799 = vsel %vm1319, %v1797, 0.0
          %1800 = vadd.xlane.f32.xlu0 %v1799
          %v1801 = vpop.xlane.xlu0 %1800
          %v1802 = vsel %vm1319, %v1798, 0.0
          %1803 = vadd.xlane.f32.xlu0 %v1802
          %v1804 = vpop.xlane.xlu0 %1803
          %v1805 = vmul.f32 %v1801, %v1662
          %v1806 = vmul.f32 %v1804, %v1662
          %v1807 = vsub.f32 %v1797, %v1805
          %v1808 = vsub.f32 %v1798, %v1806
          %v1809 = vmul.f32 %v1807, %v1807
          %v1810 = vmul.f32 %v1808, %v1808
          %v1811 = vsel %vm1319, %v1809, 0.0
          %1812 = vadd.xlane.f32.xlu0 %v1811
          %v1813 = vpop.xlane.xlu0 %1812
          %v1814 = vsel %vm1319, %v1810, 0.0
          %1815 = vadd.xlane.f32.xlu0 %v1814
          %v1816 = vpop.xlane.xlu0 %1815
          %v1817 = vmul.f32 %v1813, %v1662
          %v1818 = vmul.f32 %v1816, %v1662
          %v1819 = vadd.f32 %v1817, 1e-05
          %v1820 = vadd.f32 %v1818, 1e-05
          %v1821 = vrsqrt.pop %v1819
          %v1822 = vmul.f32 %v1821, %v1819
          %v1823 = vmul.f32 %v1822, %v1821
          %v1824 = vmul.f32 0.5, %v1823
          %v1825 = vsub.f32 1.5, %v1824
          %v1826 = vmul.f32 %v1821, %v1825
          %vm1827 = vweird.f32 %v1819
          %vm1828 = vweird.f32 %v1821
          %vm1829 = vmor %vm1827, %vm1828
          %v1830 = vsel %vm1829, %v1821, %v1826
          %v1831 = vrsqrt.pop %v1820
          %v1832 = vmul.f32 %v1831, %v1820
          %v1833 = vmul.f32 %v1832, %v1831
          %v1834 = vmul.f32 0.5, %v1833
          %v1835 = vsub.f32 1.5, %v1834
          %v1836 = vmul.f32 %v1831, %v1835
          %vm1837 = vweird.f32 %v1820
          %vm1838 = vweird.f32 %v1831
          %vm1839 = vmor %vm1837, %vm1838
          %v1840 = vsel %vm1839, %v1831, %v1836
          %v1841 = vmul.f32 %v1807, %v1830
          %v1842 = vmul.f32 %v1808, %v1840
          %v1843 = vperm.slane %v1289, 6
          %v1844 = vmul.f32 %v1841, %v1843
          %v1845 = vmul.f32 %v1842, %v1843
          %v1846 = vperm.slane %v1289, 7
          %v1847 = vadd.f32 %v1844, %v1846
          %v1848 = vadd.f32 %v1845, %v1846
          %1849 = vst.msk [vmem:[#allocation2] sm:$0xff] %vm1319, %v1847
          %1850 = vst.msk [vmem:[#allocation2 + $0x8] sm:$0xff] %vm1319, %v1848
        $region48: #{mert_apply.1} parent=31 // pred_fallthru
          _
        %v1851 = vld [vmem:[#allocation2] sm:$0xff]
        %v1852 = vld [vmem:[#allocation2 + $0x8] sm:$0xff]
        %vm1853 = vcmask 261120
        %v1854 = vsel %vm1853, %v1851, 0.0
        %v1855 = vsel %vm1853, %v1852, 0.0
        %1856 = vst [vmem:[%s263] sm:$0xff] %v1854
        %1857 = vst [vmem:[%s263 + $0x8] sm:$0xff] %v1855
        %p1858 = scmp.lt.s32.totalorder %s23, 2
        %s1859 = scalar_select %p1858, %s23, 2
        %p1860 = scmp.lt.s32.totalorder %s22, 1
        %s1861 = scalar_select %p1860, %s22, 1
        %s1862 = smul.addr %s1861, 2
        %s1863 = smul.addr %s1859, 4
        %s1864 = sadd.s32 %s1862, %s1863
        %s1865 = smul.addr %s1864, 8
        %s1866 = scalar_lea.vmem %s3, %s1865
        // Predicated region
        $region49: #{mert_apply.1} parent=31 // pred_check
          %p1867 = pneg %p129
        $region50: #{mert_apply.1} parent=31 // pred_check_branch
          %1869 = sbr.rel (%p1867) target = $region52
        $region51: #{mert_apply.1} parent=31 // pred_region
          _
        $region52: #{mert_apply.1} parent=31 // pred_fallthru
          _
      $region32: #{mert_apply.1} parent=5 // pred_fallthru
        _
      %p1870 = scmp.le.s32.totalorder 2, %s13
      // Predicated region
      $region53: #{mert_apply.1} parent=5 // pred_check
        %p1871 = pneg %p1870
      $region54: #{mert_apply.1} parent=5 // pred_check_branch
        %1873 = sbr.rel (%p1871) target = $region56
      $region55: #{mert_apply.1} parent=5 // pred_region
        %s1874 = ssub.s32 %s13, 2
        // Predicated region
        $region57: #{mert_apply.1} parent=55 // pred_check
          %p1875 = pneg %p135
        $region58: #{mert_apply.1} parent=55 // pred_check_branch
          %1877 = sbr.rel (%p1875) target = $region60
        $region59: #{mert_apply.1} parent=55 // pred_region
          %p1878 = scmp.lt.s32.totalorder %s25, 2
          %s1879 = scalar_select %p1878, %s25, 2
          %p1880 = scmp.lt.s32.totalorder %s24, 1
          %s1881 = scalar_select %p1880, %s24, 1
          %s1882 = smul.addr %s1881, 2
          %s1883 = smul.addr %s1879, 4
          %s1884 = sadd.s32 %s1882, %s1883
          %s1885 = smul.addr %s1884, 8
          %s1886 = scalar_lea.vmem %s3, %s1885
        $region60: #{mert_apply.1} parent=55 // pred_fallthru
          _
      $region56: #{mert_apply.1} parent=5 // pred_fallthru
        _
    $region6: #{mert_apply.1} parent=1 // loop_footer
      %s17 = sadd.s32 1, %s13
    $region7: #{mert_apply.1} parent=1 // loop_footer_branch
      %12 = sbr.rel target = $region3
    $region8: #{mert_apply.1} parent=1 // loop_exit
      _
    %1887 = vsyncpa [#allocation4], 1
    %s1888 = scalar_lea.sflag [#allocation4], 1
    %1889 = vsyncpa %s1888, 1
    %1890 = vsyncpa [#allocation6], 1
    %s1891 = scalar_lea.sflag [#allocation6], 1
    %1892 = vsyncpa %s1891, 1

</llo_original>
